<compile_context>
chip_gen: v6e
topology: v6e:2x2x1
jax: 0.10.0
libtpu: 0.0.40
codegen_flags: <defaults>
</compile_context>

<pallas_src>
import functools

import jax
import jax.numpy as jnp
from jax import lax
from jax.experimental import pallas as pl
from jax.experimental.pallas import tpu as pltpu


def _boundary_kernel(pred_ref, gt_ref, out_ref, *, theta0, theta):
    _, Cb, H, W = pred_ref.shape
    CH = Cb * H
    max_pad = max((theta0 - 1) // 2, (theta - 1) // 2)

    pred = jax.nn.sigmoid(pred_ref[0].astype(jnp.float32)).reshape(CH, W)
    gt = gt_ref[0]                                               # (H, W) int32

    # one-hot for this channel block, merged to (Cb*H, W)
    c0 = pl.program_id(1) * Cb
    ch = lax.broadcasted_iota(jnp.int32, (Cb, H, W), 0) + c0
    onehot = (gt[None, :, :] == ch).astype(jnp.float32).reshape(CH, W)

    # per-row image-height index (constant along W), built once and reused
    h_idx = lax.broadcasted_iota(jnp.int32, (Cb, H, W), 1).reshape(CH, W)

    # "Neighbour at distance +/- d" helpers.  Out-of-image neighbours become 0,
    # which is exact for the >=0 quantities pooled here (window max >= centre >= 0).
    use_roll = (CH % 8 == 0 and W % 128 == 0
                and H > 2 * max_pad and W > 2 * max_pad)

    if use_roll:
        w_idx = lax.broadcasted_iota(jnp.int32, (CH, W), 1)

        def _roll_masks(idx, axis, size, d):
            # For each roll amount keep only positions whose rolled-in value is a
            # genuine +/-d in-image neighbour: robust to the rotate direction and
            # to channel boundaries crossed by rolling the merged C*H axis.
            red = 1 - axis
            masks = []
            for s in (size - d, d):
                src = pltpu.roll(idx, s, axis)
                ok = jnp.logical_or(src == idx + d, src == idx - d)
                masks.append(
                    jnp.min(ok.astype(jnp.int32), axis=red, keepdims=True) == 1)
            return masks

        h_masks = {d: _roll_masks(h_idx, 0, CH, d) for d in range(1, max_pad + 1)}
        w_masks = {d: _roll_masks(w_idx, 1, W, d) for d in range(1, max_pad + 1)}

        def nbr_h(x, d):
            m0, m1 = h_masks[d]
            return (jnp.where(m0, pltpu.roll(x, CH - d, 0), 0.0),
                    jnp.where(m1, pltpu.roll(x, d, 0), 0.0))

        def nbr_w(x, d):
            m0, m1 = w_masks[d]
            return (jnp.where(m0, pltpu.roll(x, W - d, 1), 0.0),
                    jnp.where(m1, pltpu.roll(x, d, 1), 0.0))
    else:
        # Fallback for shapes the XLU rotate cannot tile cleanly: static slice +
        # tiny zero slab (no full-size fill tensors, no -inf sentinel).
        def nbr_h(x, d):
            zpad = jnp.zeros((d, W), jnp.float32)
            up = jnp.concatenate([x[d:, :], zpad], axis=0)         # x[r + d]
            dn = jnp.concatenate([zpad, x[:CH - d, :]], axis=0)    # x[r - d]
            up = jnp.where(h_idx < (H - d), up, 0.0)               # kill cross-channel rows
            dn = jnp.where(h_idx >= d, dn, 0.0)
            return up, dn

        def nbr_w(x, d):
            zpad = jnp.zeros((CH, d), jnp.float32)
            lf = jnp.concatenate([x[:, d:], zpad], axis=1)         # x[:, w + d]
            rt = jnp.concatenate([zpad, x[:, :W - d]], axis=1)     # x[:, w - d]
            return lf, rt

    def pool(x, k):
        """k x k max-pool, stride 1, padding (k-1)//2 (exact for x >= 0)."""
        pad = (k - 1) // 2
        out = x
        for d in range(1, pad + 1):
            a, b = nbr_h(x, d)
            out = jnp.maximum(out, jnp.maximum(a, b))
        x = out
        out = x
        for d in range(1, pad + 1):
            a, b = nbr_w(x, d)
            out = jnp.maximum(out, jnp.maximum(a, b))
        return out

    inv_oh = 1.0 - onehot
    inv_pr = 1.0 - pred
    gt_b = pool(inv_oh, theta0) - inv_oh
    pred_b = pool(inv_pr, theta0) - inv_pr
    gt_b_ext = pool(gt_b, theta)
    pred_b_ext = pool(pred_b, theta)

    # Streamed reductions: every term is reduced to per-channel sums immediately,
    # so the products never persist as extra full-size temporaries.
    def csum(t):                                     # (Cb*H, W) -> (Cb, 1)
        t3 = t.reshape(Cb, H, W)
        return jnp.sum(jnp.sum(t3, axis=2), axis=1, keepdims=True)

    sums = jnp.concatenate(
        [csum(pred_b * gt_b_ext),    # numerator of P
         csum(pred_b),               # denominator of P
         csum(pred_b_ext * gt_b),    # numerator of R
         csum(gt_b)],                # denominator of R
        axis=1)                                      # (Cb, 4)
    out_ref[0, 0] = sums


def _choose_c_block(C, H, W, in_itemsize, budget_bytes=36 * 1024 * 1024):
    """Largest channel-block size (divisor of C) whose working set fits the budget.

    Rough per-channel live bytes: double-buffered input slice plus ~10 float32
    full-size intermediates (one-hot, boundary maps, pool temporaries).  The
    36 MiB budget leaves headroom inside v7x's 64 MiB VMEM.
    """
    per_c = H * W * (2 * in_itemsize + 10 * 4)
    max_cb = max(1, budget_bytes // per_c)
    cb = 1
    for d in range(1, C + 1):
        if C % d == 0 and d <= max_cb:
            cb = d
    # TODO(synk): for small C with huge H*W (per_c > budget), tile H with a
    # (theta0-1)//2 + (theta-1)//2 halo instead of relying on Cb == 1.
    return cb


def boundary_loss(pred, gt, *, theta0=3, theta=5, epsilon=1e-7):
    """pred: (N, C, H, W) float logits (any float dtype); gt: (N, H, W) int labels."""
    assert theta0 % 2 == 1 and theta % 2 == 1, "theta0/theta must be odd"
    N, C, H, W = pred.shape
    Cb = _choose_c_block(C, H, W, pred.dtype.itemsize)
    n_cblk = C // Cb
    kernel = functools.partial(_boundary_kernel, theta0=theta0, theta=theta)

    sums = pl.pallas_call(
        kernel,
        out_shape=jax.ShapeDtypeStruct((N, n_cblk, Cb, 4), jnp.float32),
        grid_spec=pltpu.PrefetchScalarGridSpec(
            num_scalar_prefetch=0,
            grid=(N, n_cblk),
            in_specs=[
                pl.BlockSpec((1, Cb, H, W), lambda n, c: (n, c, 0, 0)),
                pl.BlockSpec((1, H, W), lambda n, c: (n, 0, 0)),
            ],
            out_specs=pl.BlockSpec((1, 1, Cb, 4), lambda n, c: (n, c, 0, 0)),
        ),
        compiler_params=pltpu.CompilerParams(
            dimension_semantics=("parallel", "parallel"),
            vmem_limit_bytes=48 * 1024 * 1024),
    )(pred, gt.astype(jnp.int32))

    sums = sums.reshape(N, C, 4)
    P = sums[..., 0] / (sums[..., 1] + epsilon)
    R = sums[..., 2] / (sums[..., 3] + epsilon)
    BF1 = 2.0 * P * R / (P + R + epsilon)
    return jnp.mean(1.0 - BF1)


# ---------------- pure-JAX reference (mirrors the PyTorch module) ----------------
def _maxpool_ref(x, k):
    pad = (k - 1) // 2
    return lax.reduce_window(
        x, -jnp.inf, lax.max,
        window_dimensions=(1, 1, k, k), window_strides=(1, 1, 1, 1),
        padding=[(0, 0), (0, 0), (pad, pad), (pad, pad)])


def boundary_loss_ref(pred, gt, *, theta0=3, theta=5, epsilon=1e-7):
    N, C, H, W = pred.shape
    pred = jax.nn.sigmoid(pred.astype(jnp.float32))
    onehot = jax.nn.one_hot(gt, C, axis=1, dtype=jnp.float32)    # (N, C, H, W)
    gt_b = _maxpool_ref(1.0 - onehot, theta0) - (1.0 - onehot)
    pred_b = _maxpool_ref(1.0 - pred, theta0) - (1.0 - pred)
    gt_b_ext = _maxpool_ref(gt_b, theta)
    pred_b_ext = _maxpool_ref(pred_b, theta)
    gt_b = gt_b.reshape(N, C, -1)
    pred_b = pred_b.reshape(N, C, -1)
    gt_b_ext = gt_b_ext.reshape(N, C, -1)
    pred_b_ext = pred_b_ext.reshape(N, C, -1)
    P = jnp.sum(pred_b * gt_b_ext, axis=2) / (jnp.sum(pred_b, axis=2) + epsilon)
    R = jnp.sum(pred_b_ext * gt_b, axis=2) / (jnp.sum(gt_b, axis=2) + epsilon)
    BF1 = 2.0 * P * R / (P + R + epsilon)
    return jnp.mean(1.0 - BF1)


if __name__ == "__main__":
    key = jax.random.PRNGKey(0)

    def check(N, C, H, W):
        kp, kg = jax.random.split(jax.random.fold_in(key, H * 1000 + W))
        pred = jax.random.normal(kp, (N, C, H, W), dtype=jnp.float32)
        gt = jax.random.randint(kg, (N, H, W), 0, C, dtype=jnp.int32)
        loss = jax.block_until_ready(boundary_loss(pred, gt, theta0=3, theta=5))
        loss_ref = jax.block_until_ready(
            boundary_loss_ref(pred, gt, theta0=3, theta=5))
        assert jnp.isfinite(loss), "non-finite loss"
        assert abs(float(loss) - float(loss_ref)) < 1e-4, (
            (N, C, H, W), float(loss), float(loss_ref))

    check(2, 4, 16, 16)     # small / unaligned -> slice + zero-slab shift path
    check(2, 4, 16, 128)    # lane-aligned      -> pltpu.roll (XLU) shift path
    print("KERNEL_OK")
</pallas_src>

<mosaic_0001>
module attributes {stable_mosaic.version = 11 : i64} {
  func.func @_boundary_kernel(%arg0: i32, %arg1: i32, %arg2: memref<1x4x16x16xf32, #tpu.memory_space<vmem>>, %arg3: memref<1x16x16xi32, #tpu.memory_space<vmem>>, %arg4: memref<1x1x4x4xf32, #tpu.memory_space<vmem>>) attributes {dimension_semantics = [#tpu.dimension_semantics<parallel>, #tpu.dimension_semantics<parallel>], iteration_bounds = array<i64: 2, 1>, scalar_prefetch = 0 : i64, scratch_operands = 0 : i64, tpu.core_type = #tpu.core_type<tc>, window_params = [{transform_indices = @transform_0, window_bounds = array<i64: 1, 4, 16, 16>}, {transform_indices = @transform_1, window_bounds = array<i64: 1, 16, 16>}, {transform_indices = @transform_2, window_bounds = array<i64: 1, 1, 4, 4>}]} {
    %c0 = arith.constant 0 : index
    %c0_0 = arith.constant 0 : index
    %c0_1 = arith.constant 0 : index
    %c0_2 = arith.constant 0 : index
    %0 = vector.load %arg2[%c0, %c0_0, %c0_1, %c0_2] : memref<1x4x16x16xf32, #tpu.memory_space<vmem>>, vector<1x4x16x16xf32>
    %1 = vector.shape_cast %0 : vector<1x4x16x16xf32> to vector<4x16x16xf32>
    %2 = arith.negf %1 : vector<4x16x16xf32>
    %3 = math.exp %2 : vector<4x16x16xf32>
    %cst = arith.constant 1.000000e+00 : f32
    %4 = vector.broadcast %cst : f32 to vector<4x16x16xf32>
    %5 = arith.addf %4, %3 : vector<4x16x16xf32>
    %6 = arith.divf %4, %5 : vector<4x16x16xf32>
    %7 = vector.shape_cast %6 : vector<4x16x16xf32> to vector<64x16xf32>
    %c0_3 = arith.constant 0 : index
    %c0_4 = arith.constant 0 : index
    %c0_5 = arith.constant 0 : index
    %8 = vector.load %arg3[%c0_3, %c0_4, %c0_5] : memref<1x16x16xi32, #tpu.memory_space<vmem>>, vector<1x16x16xi32>
    %9 = vector.shape_cast %8 : vector<1x16x16xi32> to vector<16x16xi32>
    %c4_i32 = arith.constant 4 : i32
    %10 = arith.muli %arg1, %c4_i32 : i32
    %11 = tpu.iota {dimensions = array<i32: 0>} : vector<4x16x16xi32>
    %12 = vector.broadcast %10 : i32 to vector<4x16x16xi32>
    %13 = arith.addi %11, %12 : vector<4x16x16xi32>
    %14 = vector.shape_cast %9 : vector<16x16xi32> to vector<1x16x16xi32>
    %15 = vector.broadcast %14 : vector<1x16x16xi32> to vector<4x16x16xi32>
    %16 = arith.cmpi eq, %15, %13 : vector<4x16x16xi32>
    %17 = arith.extui %16 : vector<4x16x16xi1> to vector<4x16x16xi32>
    %18 = arith.sitofp %17 : vector<4x16x16xi32> to vector<4x16x16xf32>
    %19 = vector.shape_cast %18 : vector<4x16x16xf32> to vector<64x16xf32>
    %20 = tpu.iota {dimensions = array<i32: 1>} : vector<4x16x16xi32>
    %21 = vector.shape_cast %20 : vector<4x16x16xi32> to vector<64x16xi32>
    %cst_6 = arith.constant 1.000000e+00 : f32
    %22 = vector.broadcast %cst_6 : f32 to vector<64x16xf32>
    %23 = arith.subf %22, %19 : vector<64x16xf32>
    %cst_7 = arith.constant 1.000000e+00 : f32
    %24 = vector.broadcast %cst_7 : f32 to vector<64x16xf32>
    %25 = arith.subf %24, %7 : vector<64x16xf32>
    %cst_8 = arith.constant 0.000000e+00 : f32
    %26 = vector.broadcast %cst_8 : f32 to vector<1x16xf32>
    %27 = vector.extract_strided_slice %23 {offsets = [1, 0], sizes = [63, 16], strides = [1, 1]} : vector<64x16xf32> to vector<63x16xf32>
    %28 = tpu.concatenate %27, %26 in 0 : vector<63x16xf32>, vector<1x16xf32> -> vector<64x16xf32>
    %29 = vector.extract_strided_slice %23 {offsets = [0, 0], sizes = [63, 16], strides = [1, 1]} : vector<64x16xf32> to vector<63x16xf32>
    %30 = tpu.concatenate %26, %29 in 0 : vector<1x16xf32>, vector<63x16xf32> -> vector<64x16xf32>
    %c15_i32 = arith.constant 15 : i32
    %31 = vector.broadcast %c15_i32 : i32 to vector<64x16xi32>
    %32 = arith.cmpi slt, %21, %31 : vector<64x16xi32>
    %cst_9 = arith.constant 0.000000e+00 : f32
    %33 = vector.broadcast %cst_9 : f32 to vector<64x16xf32>
    %34 = arith.select %32, %28, %33 : vector<64x16xi1>, vector<64x16xf32>
    %c1_i32 = arith.constant 1 : i32
    %35 = vector.broadcast %c1_i32 : i32 to vector<64x16xi32>
    %36 = arith.cmpi sge, %21, %35 : vector<64x16xi32>
    %cst_10 = arith.constant 0.000000e+00 : f32
    %37 = vector.broadcast %cst_10 : f32 to vector<64x16xf32>
    %38 = arith.select %36, %30, %37 : vector<64x16xi1>, vector<64x16xf32>
    %39 = arith.maximumf %34, %38 : vector<64x16xf32>
    %40 = arith.maximumf %23, %39 : vector<64x16xf32>
    %cst_11 = arith.constant 0.000000e+00 : f32
    %41 = vector.broadcast %cst_11 : f32 to vector<64x1xf32>
    %42 = vector.extract_strided_slice %40 {offsets = [0, 1], sizes = [64, 15], strides = [1, 1]} : vector<64x16xf32> to vector<64x15xf32>
    %43 = tpu.concatenate %42, %41 in 1 : vector<64x15xf32>, vector<64x1xf32> -> vector<64x16xf32>
    %44 = vector.extract_strided_slice %40 {offsets = [0, 0], sizes = [64, 15], strides = [1, 1]} : vector<64x16xf32> to vector<64x15xf32>
    %45 = tpu.concatenate %41, %44 in 1 : vector<64x1xf32>, vector<64x15xf32> -> vector<64x16xf32>
    %46 = arith.maximumf %43, %45 : vector<64x16xf32>
    %47 = arith.maximumf %40, %46 : vector<64x16xf32>
    %48 = arith.subf %47, %23 : vector<64x16xf32>
    %cst_12 = arith.constant 0.000000e+00 : f32
    %49 = vector.broadcast %cst_12 : f32 to vector<1x16xf32>
    %50 = vector.extract_strided_slice %25 {offsets = [1, 0], sizes = [63, 16], strides = [1, 1]} : vector<64x16xf32> to vector<63x16xf32>
    %51 = tpu.concatenate %50, %49 in 0 : vector<63x16xf32>, vector<1x16xf32> -> vector<64x16xf32>
    %52 = vector.extract_strided_slice %25 {offsets = [0, 0], sizes = [63, 16], strides = [1, 1]} : vector<64x16xf32> to vector<63x16xf32>
    %53 = tpu.concatenate %49, %52 in 0 : vector<1x16xf32>, vector<63x16xf32> -> vector<64x16xf32>
    %c15_i32_13 = arith.constant 15 : i32
    %54 = vector.broadcast %c15_i32_13 : i32 to vector<64x16xi32>
    %55 = arith.cmpi slt, %21, %54 : vector<64x16xi32>
    %cst_14 = arith.constant 0.000000e+00 : f32
    %56 = vector.broadcast %cst_14 : f32 to vector<64x16xf32>
    %57 = arith.select %55, %51, %56 : vector<64x16xi1>, vector<64x16xf32>
    %c1_i32_15 = arith.constant 1 : i32
    %58 = vector.broadcast %c1_i32_15 : i32 to vector<64x16xi32>
    %59 = arith.cmpi sge, %21, %58 : vector<64x16xi32>
    %cst_16 = arith.constant 0.000000e+00 : f32
    %60 = vector.broadcast %cst_16 : f32 to vector<64x16xf32>
    %61 = arith.select %59, %53, %60 : vector<64x16xi1>, vector<64x16xf32>
    %62 = arith.maximumf %57, %61 : vector<64x16xf32>
    %63 = arith.maximumf %25, %62 : vector<64x16xf32>
    %cst_17 = arith.constant 0.000000e+00 : f32
    %64 = vector.broadcast %cst_17 : f32 to vector<64x1xf32>
    %65 = vector.extract_strided_slice %63 {offsets = [0, 1], sizes = [64, 15], strides = [1, 1]} : vector<64x16xf32> to vector<64x15xf32>
    %66 = tpu.concatenate %65, %64 in 1 : vector<64x15xf32>, vector<64x1xf32> -> vector<64x16xf32>
    %67 = vector.extract_strided_slice %63 {offsets = [0, 0], sizes = [64, 15], strides = [1, 1]} : vector<64x16xf32> to vector<64x15xf32>
    %68 = tpu.concatenate %64, %67 in 1 : vector<64x1xf32>, vector<64x15xf32> -> vector<64x16xf32>
    %69 = arith.maximumf %66, %68 : vector<64x16xf32>
    %70 = arith.maximumf %63, %69 : vector<64x16xf32>
    %71 = arith.subf %70, %25 : vector<64x16xf32>
    %cst_18 = arith.constant 0.000000e+00 : f32
    %72 = vector.broadcast %cst_18 : f32 to vector<1x16xf32>
    %73 = vector.extract_strided_slice %48 {offsets = [1, 0], sizes = [63, 16], strides = [1, 1]} : vector<64x16xf32> to vector<63x16xf32>
    %74 = tpu.concatenate %73, %72 in 0 : vector<63x16xf32>, vector<1x16xf32> -> vector<64x16xf32>
    %75 = vector.extract_strided_slice %48 {offsets = [0, 0], sizes = [63, 16], strides = [1, 1]} : vector<64x16xf32> to vector<63x16xf32>
    %76 = tpu.concatenate %72, %75 in 0 : vector<1x16xf32>, vector<63x16xf32> -> vector<64x16xf32>
    %c15_i32_19 = arith.constant 15 : i32
    %77 = vector.broadcast %c15_i32_19 : i32 to vector<64x16xi32>
    %78 = arith.cmpi slt, %21, %77 : vector<64x16xi32>
    %cst_20 = arith.constant 0.000000e+00 : f32
    %79 = vector.broadcast %cst_20 : f32 to vector<64x16xf32>
    %80 = arith.select %78, %74, %79 : vector<64x16xi1>, vector<64x16xf32>
    %c1_i32_21 = arith.constant 1 : i32
    %81 = vector.broadcast %c1_i32_21 : i32 to vector<64x16xi32>
    %82 = arith.cmpi sge, %21, %81 : vector<64x16xi32>
    %cst_22 = arith.constant 0.000000e+00 : f32
    %83 = vector.broadcast %cst_22 : f32 to vector<64x16xf32>
    %84 = arith.select %82, %76, %83 : vector<64x16xi1>, vector<64x16xf32>
    %85 = arith.maximumf %80, %84 : vector<64x16xf32>
    %86 = arith.maximumf %48, %85 : vector<64x16xf32>
    %cst_23 = arith.constant 0.000000e+00 : f32
    %87 = vector.broadcast %cst_23 : f32 to vector<2x16xf32>
    %88 = vector.extract_strided_slice %48 {offsets = [2, 0], sizes = [62, 16], strides = [1, 1]} : vector<64x16xf32> to vector<62x16xf32>
    %89 = tpu.concatenate %88, %87 in 0 : vector<62x16xf32>, vector<2x16xf32> -> vector<64x16xf32>
    %90 = vector.extract_strided_slice %48 {offsets = [0, 0], sizes = [62, 16], strides = [1, 1]} : vector<64x16xf32> to vector<62x16xf32>
    %91 = tpu.concatenate %87, %90 in 0 : vector<2x16xf32>, vector<62x16xf32> -> vector<64x16xf32>
    %c14_i32 = arith.constant 14 : i32
    %92 = vector.broadcast %c14_i32 : i32 to vector<64x16xi32>
    %93 = arith.cmpi slt, %21, %92 : vector<64x16xi32>
    %cst_24 = arith.constant 0.000000e+00 : f32
    %94 = vector.broadcast %cst_24 : f32 to vector<64x16xf32>
    %95 = arith.select %93, %89, %94 : vector<64x16xi1>, vector<64x16xf32>
    %c2_i32 = arith.constant 2 : i32
    %96 = vector.broadcast %c2_i32 : i32 to vector<64x16xi32>
    %97 = arith.cmpi sge, %21, %96 : vector<64x16xi32>
    %cst_25 = arith.constant 0.000000e+00 : f32
    %98 = vector.broadcast %cst_25 : f32 to vector<64x16xf32>
    %99 = arith.select %97, %91, %98 : vector<64x16xi1>, vector<64x16xf32>
    %100 = arith.maximumf %95, %99 : vector<64x16xf32>
    %101 = arith.maximumf %86, %100 : vector<64x16xf32>
    %cst_26 = arith.constant 0.000000e+00 : f32
    %102 = vector.broadcast %cst_26 : f32 to vector<64x1xf32>
    %103 = vector.extract_strided_slice %101 {offsets = [0, 1], sizes = [64, 15], strides = [1, 1]} : vector<64x16xf32> to vector<64x15xf32>
    %104 = tpu.concatenate %103, %102 in 1 : vector<64x15xf32>, vector<64x1xf32> -> vector<64x16xf32>
    %105 = vector.extract_strided_slice %101 {offsets = [0, 0], sizes = [64, 15], strides = [1, 1]} : vector<64x16xf32> to vector<64x15xf32>
    %106 = tpu.concatenate %102, %105 in 1 : vector<64x1xf32>, vector<64x15xf32> -> vector<64x16xf32>
    %107 = arith.maximumf %104, %106 : vector<64x16xf32>
    %108 = arith.maximumf %101, %107 : vector<64x16xf32>
    %cst_27 = arith.constant 0.000000e+00 : f32
    %109 = vector.broadcast %cst_27 : f32 to vector<64x2xf32>
    %110 = vector.extract_strided_slice %101 {offsets = [0, 2], sizes = [64, 14], strides = [1, 1]} : vector<64x16xf32> to vector<64x14xf32>
    %111 = tpu.concatenate %110, %109 in 1 : vector<64x14xf32>, vector<64x2xf32> -> vector<64x16xf32>
    %112 = vector.extract_strided_slice %101 {offsets = [0, 0], sizes = [64, 14], strides = [1, 1]} : vector<64x16xf32> to vector<64x14xf32>
    %113 = tpu.concatenate %109, %112 in 1 : vector<64x2xf32>, vector<64x14xf32> -> vector<64x16xf32>
    %114 = arith.maximumf %111, %113 : vector<64x16xf32>
    %115 = arith.maximumf %108, %114 : vector<64x16xf32>
    %cst_28 = arith.constant 0.000000e+00 : f32
    %116 = vector.broadcast %cst_28 : f32 to vector<1x16xf32>
    %117 = vector.extract_strided_slice %71 {offsets = [1, 0], sizes = [63, 16], strides = [1, 1]} : vector<64x16xf32> to vector<63x16xf32>
    %118 = tpu.concatenate %117, %116 in 0 : vector<63x16xf32>, vector<1x16xf32> -> vector<64x16xf32>
    %119 = vector.extract_strided_slice %71 {offsets = [0, 0], sizes = [63, 16], strides = [1, 1]} : vector<64x16xf32> to vector<63x16xf32>
    %120 = tpu.concatenate %116, %119 in 0 : vector<1x16xf32>, vector<63x16xf32> -> vector<64x16xf32>
    %c15_i32_29 = arith.constant 15 : i32
    %121 = vector.broadcast %c15_i32_29 : i32 to vector<64x16xi32>
    %122 = arith.cmpi slt, %21, %121 : vector<64x16xi32>
    %cst_30 = arith.constant 0.000000e+00 : f32
    %123 = vector.broadcast %cst_30 : f32 to vector<64x16xf32>
    %124 = arith.select %122, %118, %123 : vector<64x16xi1>, vector<64x16xf32>
    %c1_i32_31 = arith.constant 1 : i32
    %125 = vector.broadcast %c1_i32_31 : i32 to vector<64x16xi32>
    %126 = arith.cmpi sge, %21, %125 : vector<64x16xi32>
    %cst_32 = arith.constant 0.000000e+00 : f32
    %127 = vector.broadcast %cst_32 : f32 to vector<64x16xf32>
    %128 = arith.select %126, %120, %127 : vector<64x16xi1>, vector<64x16xf32>
    %129 = arith.maximumf %124, %128 : vector<64x16xf32>
    %130 = arith.maximumf %71, %129 : vector<64x16xf32>
    %cst_33 = arith.constant 0.000000e+00 : f32
    %131 = vector.broadcast %cst_33 : f32 to vector<2x16xf32>
    %132 = vector.extract_strided_slice %71 {offsets = [2, 0], sizes = [62, 16], strides = [1, 1]} : vector<64x16xf32> to vector<62x16xf32>
    %133 = tpu.concatenate %132, %131 in 0 : vector<62x16xf32>, vector<2x16xf32> -> vector<64x16xf32>
    %134 = vector.extract_strided_slice %71 {offsets = [0, 0], sizes = [62, 16], strides = [1, 1]} : vector<64x16xf32> to vector<62x16xf32>
    %135 = tpu.concatenate %131, %134 in 0 : vector<2x16xf32>, vector<62x16xf32> -> vector<64x16xf32>
    %c14_i32_34 = arith.constant 14 : i32
    %136 = vector.broadcast %c14_i32_34 : i32 to vector<64x16xi32>
    %137 = arith.cmpi slt, %21, %136 : vector<64x16xi32>
    %cst_35 = arith.constant 0.000000e+00 : f32
    %138 = vector.broadcast %cst_35 : f32 to vector<64x16xf32>
    %139 = arith.select %137, %133, %138 : vector<64x16xi1>, vector<64x16xf32>
    %c2_i32_36 = arith.constant 2 : i32
    %140 = vector.broadcast %c2_i32_36 : i32 to vector<64x16xi32>
    %141 = arith.cmpi sge, %21, %140 : vector<64x16xi32>
    %cst_37 = arith.constant 0.000000e+00 : f32
    %142 = vector.broadcast %cst_37 : f32 to vector<64x16xf32>
    %143 = arith.select %141, %135, %142 : vector<64x16xi1>, vector<64x16xf32>
    %144 = arith.maximumf %139, %143 : vector<64x16xf32>
    %145 = arith.maximumf %130, %144 : vector<64x16xf32>
    %cst_38 = arith.constant 0.000000e+00 : f32
    %146 = vector.broadcast %cst_38 : f32 to vector<64x1xf32>
    %147 = vector.extract_strided_slice %145 {offsets = [0, 1], sizes = [64, 15], strides = [1, 1]} : vector<64x16xf32> to vector<64x15xf32>
    %148 = tpu.concatenate %147, %146 in 1 : vector<64x15xf32>, vector<64x1xf32> -> vector<64x16xf32>
    %149 = vector.extract_strided_slice %145 {offsets = [0, 0], sizes = [64, 15], strides = [1, 1]} : vector<64x16xf32> to vector<64x15xf32>
    %150 = tpu.concatenate %146, %149 in 1 : vector<64x1xf32>, vector<64x15xf32> -> vector<64x16xf32>
    %151 = arith.maximumf %148, %150 : vector<64x16xf32>
    %152 = arith.maximumf %145, %151 : vector<64x16xf32>
    %cst_39 = arith.constant 0.000000e+00 : f32
    %153 = vector.broadcast %cst_39 : f32 to vector<64x2xf32>
    %154 = vector.extract_strided_slice %145 {offsets = [0, 2], sizes = [64, 14], strides = [1, 1]} : vector<64x16xf32> to vector<64x14xf32>
    %155 = tpu.concatenate %154, %153 in 1 : vector<64x14xf32>, vector<64x2xf32> -> vector<64x16xf32>
    %156 = vector.extract_strided_slice %145 {offsets = [0, 0], sizes = [64, 14], strides = [1, 1]} : vector<64x16xf32> to vector<64x14xf32>
    %157 = tpu.concatenate %153, %156 in 1 : vector<64x2xf32>, vector<64x14xf32> -> vector<64x16xf32>
    %158 = arith.maximumf %155, %157 : vector<64x16xf32>
    %159 = arith.maximumf %152, %158 : vector<64x16xf32>
    %160 = arith.mulf %71, %115 : vector<64x16xf32>
    %161 = vector.shape_cast %160 : vector<64x16xf32> to vector<4x16x16xf32>
    %cst_40 = arith.constant dense<0.000000e+00> : vector<4x16xf32>
    %162 = vector.multi_reduction <add>, %161, %cst_40 [2] : vector<4x16x16xf32> to vector<4x16xf32>
    %cst_41 = arith.constant dense<0.000000e+00> : vector<4xf32>
    %163 = vector.multi_reduction <add>, %162, %cst_41 [1] : vector<4x16xf32> to vector<4xf32>
    %164 = vector.shape_cast %163 : vector<4xf32> to vector<4x1xf32>
    %165 = vector.shape_cast %71 : vector<64x16xf32> to vector<4x16x16xf32>
    %cst_42 = arith.constant dense<0.000000e+00> : vector<4x16xf32>
    %166 = vector.multi_reduction <add>, %165, %cst_42 [2] : vector<4x16x16xf32> to vector<4x16xf32>
    %cst_43 = arith.constant dense<0.000000e+00> : vector<4xf32>
    %167 = vector.multi_reduction <add>, %166, %cst_43 [1] : vector<4x16xf32> to vector<4xf32>
    %168 = vector.shape_cast %167 : vector<4xf32> to vector<4x1xf32>
    %169 = arith.mulf %159, %48 : vector<64x16xf32>
    %170 = vector.shape_cast %169 : vector<64x16xf32> to vector<4x16x16xf32>
    %cst_44 = arith.constant dense<0.000000e+00> : vector<4x16xf32>
    %171 = vector.multi_reduction <add>, %170, %cst_44 [2] : vector<4x16x16xf32> to vector<4x16xf32>
    %cst_45 = arith.constant dense<0.000000e+00> : vector<4xf32>
    %172 = vector.multi_reduction <add>, %171, %cst_45 [1] : vector<4x16xf32> to vector<4xf32>
    %173 = vector.shape_cast %172 : vector<4xf32> to vector<4x1xf32>
    %174 = vector.shape_cast %48 : vector<64x16xf32> to vector<4x16x16xf32>
    %cst_46 = arith.constant dense<0.000000e+00> : vector<4x16xf32>
    %175 = vector.multi_reduction <add>, %174, %cst_46 [2] : vector<4x16x16xf32> to vector<4x16xf32>
    %cst_47 = arith.constant dense<0.000000e+00> : vector<4xf32>
    %176 = vector.multi_reduction <add>, %175, %cst_47 [1] : vector<4x16xf32> to vector<4xf32>
    %177 = vector.shape_cast %176 : vector<4xf32> to vector<4x1xf32>
    %178 = tpu.concatenate %164, %168, %173, %177 in 1 : vector<4x1xf32>, vector<4x1xf32>, vector<4x1xf32>, vector<4x1xf32> -> vector<4x4xf32>
    %c0_48 = arith.constant 0 : index
    %c0_49 = arith.constant 0 : index
    %c0_50 = arith.constant 0 : index
    %c0_51 = arith.constant 0 : index
    %179 = vector.load %arg4[%c0_48, %c0_49, %c0_50, %c0_51] : memref<1x1x4x4xf32, #tpu.memory_space<vmem>>, vector<1x1x4x4xf32>
    %180 = vector.shape_cast %179 : vector<1x1x4x4xf32> to vector<4x4xf32>
    %181 = vector.shape_cast %178 : vector<4x4xf32> to vector<1x1x4x4xf32>
    tpu.vector_store %arg4[%c0_48, %c0_49, %c0_50, %c0_51], %181 {strides = array<i32>} : memref<1x1x4x4xf32, #tpu.memory_space<vmem>>, vector<1x1x4x4xf32>,
    return
  }
  func.func @transform_0(%arg0: i32, %arg1: i32) -> (i32, i32, i32, i32) {
    %c0_i32 = arith.constant 0 : i32
    %c0_i32_0 = arith.constant 0 : i32
    %c0_i32_1 = arith.constant 0 : i32
    return %arg0, %arg1, %c0_i32, %c0_i32_0 : i32, i32, i32, i32
  }
  func.func @transform_1(%arg0: i32, %arg1: i32) -> (i32, i32, i32) {
    %c0_i32 = arith.constant 0 : i32
    %c0_i32_0 = arith.constant 0 : i32
    %c0_i32_1 = arith.constant 0 : i32
    return %arg0, %c0_i32, %c0_i32_0 : i32, i32, i32
  }
  func.func @transform_2(%arg0: i32, %arg1: i32) -> (i32, i32, i32, i32) {
    %c0_i32 = arith.constant 0 : i32
    %c0_i32_0 = arith.constant 0 : i32
    %c0_i32_1 = arith.constant 0 : i32
    return %arg0, %arg1, %c0_i32, %c0_i32_0 : i32, i32, i32, i32
  }
}

</mosaic_0001>

<llo_original>
// kernel: tpu_custom_call.1
$region0: #{tpu_custom_call.1}
  #allocation0 [shape = 'u32[]', space=smem, size = 0x4, offset = 0x4, fixed_abs, tag = 'smem constant byte address 0x4 - core index']
  #allocation1 [shape = 'u32[144,128]{1,0:T(1,128)}', space=vmem, size = 0x12000, scoped, tag = 'internal scratch']
  %s0 = inlined_call_operand.hbm [shape: f32[2,4,16,16], index: 0, kind: input, shape index: {}]
  %s1 = inlined_call_operand.hbm [shape: s32[2,16,16], index: 1, kind: input, shape index: {}]
  %s2 = inlined_call_operand.hbm [shape: f32[2,1,4,4], index: 2, kind: output, shape index: {}]
  %s3 = sld [smem:[#allocation0]]
  $region49: #{tpu_custom_call.1} parent=0
    _
  %s5 = ssub.s32 1, %s3
  %s6 = scalar_select 0, %s5, %s3
  $region1: #{tpu_custom_call.1} parent=0
    #allocation2 [shape = 'u8[65536]{0}', space=vmem, size = 0x10000, scoped, tag = 'input window, operand 0']
    #allocation3 [shape = 's32[2]{0}', space=sflag, size = 0x8, scoped, tag = 'scoped memory for tpu_custom_call.1']
    #allocation4 [shape = 's32[2]{0}', space=sflag, size = 0x8, scoped, tag = 'scoped memory for tpu_custom_call.1']
    #allocation5 [shape = 'u8[16384]{0}', space=vmem, size = 0x4000, scoped, tag = 'input window, operand 1']
    #allocation6 [shape = 's32[2]{0}', space=sflag, size = 0x8, scoped, tag = 'scoped memory for tpu_custom_call.1']
    #allocation7 [shape = 'u8[4096]{0}', space=vmem, size = 0x1000, scoped, tag = 'output window, operand 0']
    %7 = vsyncpa [#allocation3], 0
    %s8 = scalar_lea.sflag [#allocation3], 1
    %9 = vsyncpa %s8, 0
    %10 = vsyncpa [#allocation6], 0
    %s11 = scalar_lea.sflag [#allocation6], 1
    %12 = vsyncpa %s11, 0
    %13 = vsyncpa [#allocation4], 0
    %s14 = scalar_lea.sflag [#allocation4], 1
    %15 = vsyncpa %s14, 0
    loop: start=0, step=1, limit=4
    $region2: #{tpu_custom_call.1} parent=1 // loop_pre_header
      _
    $region3: #{tpu_custom_call.1} parent=1 // loop_header
      %s17 = sphi 0, %s21
      %p18 = scmp.ge.s32.totalorder %s17, 4
      %s24 = sphi 0, %s36
      %s25 = sphi 0, %s32
      %s26 = sphi 0, %s24
      %s27 = sphi 0, %s25
      %s28 = sphi 0, %s26
      %s29 = sphi 0, %s27
      %s41 = sphi 0, %s43
      %s44 = sphi 0, %s41
      %s45 = sphi 0, %s44
      %s61 = sphi 0, %s45
      %s67 = sphi 0, %s69
      %s70 = sphi 0, %s67
      %s71 = sphi 0, %s70
      %s87 = sphi 0, %s71
      %s95 = sphi 0, %s97
      %s98 = sphi 0, %s95
      %s99 = sphi 0, %s98
      %s115 = sphi 0, %s99
    $region4: #{tpu_custom_call.1} parent=1 // loop_header_branch
      %20 = sbr.rel (%p18) target = $region8
    $region5: #{tpu_custom_call.1} parent=1 // loop_body
      %s22 = ssub.s32 %s17, 1
      %s23 = ssub.s32 %s17, 2
      %s30 = sadd.s32 1, %s25
      %p31 = scmp.ge.s32.totalorder %s30, 1
      %s32 = scalar_select %p31, 0, %s30
      %s33 = sadd.s32 1, %s24
      %s34 = scalar_select %p31, %s33, %s24
      %p35 = scmp.ge.s32.totalorder %s34, 2
      %s36 = scalar_select %p35, 0, %s34
      %s37 = ssub.s32 %s24, %s36
      %s38 = ssub.s32 %s25, %s32
      %s39 = sor.u32 %s37, %s38
      %p40 = scmp.eq.s32.totalorder %s39, 0
      %s42 = sadd.s32 %s41, 1
      %s43 = scalar_select %p40, %s41, %s42
      %p46 = pneg %p40
      %p47 = scmp.eq.s32.totalorder %s17, 1
      %p48 = por %p46, %p47
      %p49 = scmp.ne.s32.totalorder %s41, %s44
      %p50 = scmp.eq.s32.totalorder %s17, 0
      %p51 = por %p49, %p50
      %p52 = scmp.ne.s32.totalorder %s41, %s44
      %p53 = scmp.eq.s32.totalorder %s22, 1
      %p54 = por %p52, %p53
      %p55 = scmp.ne.s32.totalorder %s44, %s45
      %p56 = scmp.eq.s32.totalorder %s22, 0
      %p57 = por %p55, %p56
      %p58 = scmp.ne.s32.totalorder %s44, %s45
      %p59 = scmp.eq.s32.totalorder %s23, 1
      %p60 = por %p58, %p59
      %p62 = scmp.ne.s32.totalorder %s45, %s61
      %p63 = scmp.eq.s32.totalorder %s23, 0
      %p64 = por %p62, %p63
      %s65 = ssub.s32 %s24, %s36
      %p66 = scmp.eq.s32.totalorder %s65, 0
      %s68 = sadd.s32 %s67, 1
      %s69 = scalar_select %p66, %s67, %s68
      %p72 = pneg %p66
      %p73 = scmp.eq.s32.totalorder %s17, 1
      %p74 = por %p72, %p73
      %p75 = scmp.ne.s32.totalorder %s67, %s70
      %p76 = scmp.eq.s32.totalorder %s17, 0
      %p77 = por %p75, %p76
      %p78 = scmp.ne.s32.totalorder %s67, %s70
      %p79 = scmp.eq.s32.totalorder %s22, 1
      %p80 = por %p78, %p79
      %p81 = scmp.ne.s32.totalorder %s70, %s71
      %p82 = scmp.eq.s32.totalorder %s22, 0
      %p83 = por %p81, %p82
      %p84 = scmp.ne.s32.totalorder %s70, %s71
      %p85 = scmp.eq.s32.totalorder %s23, 1
      %p86 = por %p84, %p85
      %p88 = scmp.ne.s32.totalorder %s71, %s87
      %p89 = scmp.eq.s32.totalorder %s23, 0
      %p90 = por %p88, %p89
      %s91 = ssub.s32 %s24, %s36
      %s92 = ssub.s32 %s25, %s32
      %s93 = sor.u32 %s91, %s92
      %p94 = scmp.eq.s32.totalorder %s93, 0
      %s96 = sadd.s32 %s95, 1
      %s97 = scalar_select %p94, %s95, %s96
      %p100 = pneg %p94
      %p101 = scmp.eq.s32.totalorder %s17, 1
      %p102 = por %p100, %p101
      %p103 = scmp.ne.s32.totalorder %s95, %s98
      %p104 = scmp.eq.s32.totalorder %s17, 0
      %p105 = por %p103, %p104
      %p106 = scmp.ne.s32.totalorder %s95, %s98
      %p107 = scmp.eq.s32.totalorder %s22, 1
      %p108 = por %p106, %p107
      %p109 = scmp.ne.s32.totalorder %s98, %s99
      %p110 = scmp.eq.s32.totalorder %s22, 0
      %p111 = por %p109, %p110
      %p112 = scmp.ne.s32.totalorder %s98, %s99
      %p113 = scmp.eq.s32.totalorder %s23, 1
      %p114 = por %p112, %p113
      %p116 = scmp.ne.s32.totalorder %s99, %s115
      %p117 = scmp.eq.s32.totalorder %s23, 0
      %p118 = por %p116, %p117
      %p119 = scmp.le.s32.totalorder 1, %s17
      %p120 = scmp.lt.s32.totalorder %s17, 3
      %p121 = pnand %p119, %p120
      %p122 = pneg %p121
      // Predicated region
      $region9: #{tpu_custom_call.1} parent=5 // pred_check
        _
      $region10: #{tpu_custom_call.1} parent=5 // pred_check_branch
        %124 = sbr.rel (%p121) target = $region12
      $region11: #{tpu_custom_call.1} parent=5 // pred_region
        %s125 = ssub.s32 %s17, 1
      $region12: #{tpu_custom_call.1} parent=5 // pred_fallthru
        _
      %p126 = scmp.lt.s32.totalorder %s17, 2
      // Predicated region
      $region13: #{tpu_custom_call.1} parent=5 // pred_check
        %p127 = pneg %p126
      $region14: #{tpu_custom_call.1} parent=5 // pred_check_branch
        %129 = sbr.rel (%p127) target = $region16
      $region15: #{tpu_custom_call.1} parent=5 // pred_region
        // Predicated region
        $region17: #{tpu_custom_call.1} parent=15 // pred_check
          %p130 = pneg %p51
        $region18: #{tpu_custom_call.1} parent=15 // pred_check_branch
          %132 = sbr.rel (%p130) target = $region20
        $region19: #{tpu_custom_call.1} parent=15 // pred_region
          %s133 = sand.u32 %s41, 1
          %s134 = scalar_lea.sflag [#allocation3], %s133
          %s135 = sand.u32 %s41, 1
          %s136 = smul.addr %s135, 64
          %s137 = scalar_lea.vmem [#allocation2], %s136
          %s138 = smul.u32 4, %s25
          %s140 = ssub.s32 1024, 1024
          %141 = vsyncadd %s134, %s140
          %s142 = smul.addr %s138, 2
          %s143 = smul.addr %s24, 8
          %s144 = sadd.s32 %s142, %s143
          %s145 = smul.addr %s144, 128
          %s146 = scalar_lea.hbm %s0, %s145
          %s147 = sshll.u32 %s137, 4
          %s148 = int_to_ptr.vmem [resolvable:$true] %s147
          %153 = dma.hbm_to_vmem [thread:$0]  %s146, 1024, %s148, %s134, 128, 128, 8
        $region20: #{tpu_custom_call.1} parent=15 // pred_fallthru
          _
        // Predicated region
        $region21: #{tpu_custom_call.1} parent=15 // pred_check
          %p154 = pneg %p77
        $region22: #{tpu_custom_call.1} parent=15 // pred_check_branch
          %156 = sbr.rel (%p154) target = $region24
        $region23: #{tpu_custom_call.1} parent=15 // pred_region
          %s157 = sand.u32 %s67, 1
          %s158 = scalar_lea.sflag [#allocation6], %s157
          %s159 = sand.u32 %s67, 1
          %s160 = smul.addr %s159, 16
          %s161 = scalar_lea.vmem [#allocation5], %s160
          %s163 = ssub.s32 256, 256
          %164 = vsyncadd %s158, %s163
          %s165 = smul.addr %s24, 2
          %s166 = smul.addr %s165, 128
          %s167 = scalar_lea.hbm %s1, %s166
          %s168 = sshll.u32 %s161, 4
          %s169 = int_to_ptr.vmem [resolvable:$true] %s168
          %174 = dma.hbm_to_vmem [thread:$0]  %s167, 256, %s169, %s158, 128, 128, 8
        $region24: #{tpu_custom_call.1} parent=15 // pred_fallthru
          _
      $region16: #{tpu_custom_call.1} parent=5 // pred_fallthru
        _
      %p175 = scmp.le.s32.totalorder 1, %s17
      %p176 = scmp.lt.s32.totalorder %s17, 3
      %p177 = pnand %p175, %p176
      %p178 = pneg %p177
      // Predicated region
      $region25: #{tpu_custom_call.1} parent=5 // pred_check
        _
      $region26: #{tpu_custom_call.1} parent=5 // pred_check_branch
        %180 = sbr.rel (%p177) target = $region28
      $region27: #{tpu_custom_call.1} parent=5 // pred_region
        %s181 = ssub.s32 %s17, 1
        %s182 = sand.u32 %s44, 1
        %s183 = scalar_lea.sflag [#allocation3], %s182
        %s184 = sand.u32 %s44, 1
        %s185 = smul.addr %s184, 64
        %s186 = scalar_lea.vmem [#allocation2], %s185
        // Predicated region
        $region29: #{tpu_custom_call.1} parent=27 // pred_check
          %p187 = pneg %p57
        $region30: #{tpu_custom_call.1} parent=27 // pred_check_branch
          %189 = sbr.rel (%p187) target = $region32
        $region31: #{tpu_custom_call.1} parent=27 // pred_region
          %190 = dma.done %s183, 1024
        $region32: #{tpu_custom_call.1} parent=27 // pred_fallthru
          _
        %s191 = sand.u32 %s70, 1
        %s192 = scalar_lea.sflag [#allocation6], %s191
        %s193 = sand.u32 %s70, 1
        %s194 = smul.addr %s193, 16
        %s195 = scalar_lea.vmem [#allocation5], %s194
        // Predicated region
        $region33: #{tpu_custom_call.1} parent=27 // pred_check
          %p196 = pneg %p83
        $region34: #{tpu_custom_call.1} parent=27 // pred_check_branch
          %198 = sbr.rel (%p196) target = $region36
        $region35: #{tpu_custom_call.1} parent=27 // pred_region
          %199 = dma.done %s192, 256
        $region36: #{tpu_custom_call.1} parent=27 // pred_fallthru
          _
        %s200 = sand.u32 %s44, 1
        %s201 = scalar_lea.sflag [#allocation3], %s200
        %s202 = sand.u32 %s44, 1
        %s203 = smul.addr %s202, 64
        %s204 = scalar_lea.vmem [#allocation2], %s203
        %p205 = pneg %p57
        %p206 = pneg %p54
        %s207 = sand.u32 %s70, 1
        %s208 = scalar_lea.sflag [#allocation6], %s207
        %s209 = sand.u32 %s70, 1
        %s210 = smul.addr %s209, 16
        %s211 = scalar_lea.vmem [#allocation5], %s210
        %p212 = pneg %p83
        %p213 = pneg %p80
        %p214 = pneg %p111
        %p215 = pneg %p108
        %s216 = sand.u32 %s98, 1
        %s217 = scalar_lea.sflag [#allocation4], %s216
        %s218 = sand.u32 %s98, 1
        %s219 = smul.addr %s218, 4
        %s220 = scalar_lea.vmem [#allocation7], %s219
        %s221 = smul.u32 4, %s27
        %v222 = vld [vmem:[%s186] sm:$0xff]
        %v223 = vld [vmem:[%s186 + $0x8] sm:$0xff]
        %v224 = vld [vmem:[%s186 + $0x10] sm:$0xff]
        %v225 = vld [vmem:[%s186 + $0x18] sm:$0xff]
        %v226 = vld [vmem:[%s186 + $0x20] sm:$0xff]
        %v227 = vld [vmem:[%s186 + $0x28] sm:$0xff]
        %v228 = vld [vmem:[%s186 + $0x30] sm:$0xff]
        %v229 = vld [vmem:[%s186 + $0x38] sm:$0xff]
        %v230 = vxor.u32 %v222, 2147483648
        %v231 = vxor.u32 %v223, 2147483648
        %v232 = vxor.u32 %v224, 2147483648
        %v233 = vxor.u32 %v225, 2147483648
        %v234 = vxor.u32 %v226, 2147483648
        %v235 = vxor.u32 %v227, 2147483648
        %v236 = vxor.u32 %v228, 2147483648
        %v237 = vxor.u32 %v229, 2147483648
        %v238 = vmul.f32 %v230, 1.442695
        %v239 = vpow.pop %v238
        %v240 = vmul.f32 %v231, 1.442695
        %v241 = vpow.pop %v240
        %v242 = vmul.f32 %v232, 1.442695
        %v243 = vpow.pop %v242
        %v244 = vmul.f32 %v233, 1.442695
        %v245 = vpow.pop %v244
        %v246 = vmul.f32 %v234, 1.442695
        %v247 = vpow.pop %v246
        %v248 = vmul.f32 %v235, 1.442695
        %v249 = vpow.pop %v248
        %v250 = vmul.f32 %v236, 1.442695
        %v251 = vpow.pop %v250
        %v252 = vmul.f32 %v237, 1.442695
        %v253 = vpow.pop %v252
        %v254 = vadd.f32 %v239, 1.0
        %v255 = vadd.f32 %v241, 1.0
        %v256 = vadd.f32 %v243, 1.0
        %v257 = vadd.f32 %v245, 1.0
        %v258 = vadd.f32 %v247, 1.0
        %v259 = vadd.f32 %v249, 1.0
        %v260 = vadd.f32 %v251, 1.0
        %v261 = vadd.f32 %v253, 1.0
        %v262 = vrcp.pop %v254
        %v263 = vmul.f32 1.0, %v262
        %v264 = vrcp.pop %v255
        %v265 = vmul.f32 1.0, %v264
        %v266 = vrcp.pop %v256
        %v267 = vmul.f32 1.0, %v266
        %v268 = vrcp.pop %v257
        %v269 = vmul.f32 1.0, %v268
        %v270 = vrcp.pop %v258
        %v271 = vmul.f32 1.0, %v270
        %v272 = vrcp.pop %v259
        %v273 = vmul.f32 1.0, %v272
        %v274 = vrcp.pop %v260
        %v275 = vmul.f32 1.0, %v274
        %v276 = vrcp.pop %v261
        %v277 = vmul.f32 1.0, %v276
        %v278 = vld [vmem:[%s195] sm:$0xff]
        %v279 = vld [vmem:[%s195 + $0x8] sm:$0xff]
        %s280 = smul.u32 %s27, 4
        %v281 = vstv %s280
        %v282 = vadd.s32 %v281, 1
        %v283 = vadd.s32 %v281, 2
        %v284 = vadd.s32 %v281, 3
        %vm285 = vcmp.eq.s32.totalorder %v278, %v281
        %vm286 = vcmp.eq.s32.totalorder %v279, %v281
        %vm287 = vcmp.eq.s32.totalorder %v278, %v282
        %vm288 = vcmp.eq.s32.totalorder %v279, %v282
        %vm289 = vcmp.eq.s32.totalorder %v278, %v283
        %vm290 = vcmp.eq.s32.totalorder %v279, %v283
        %vm291 = vcmp.eq.s32.totalorder %v278, %v284
        %vm292 = vcmp.eq.s32.totalorder %v279, %v284
        %v293 = vsel %vm285, 1, 0
        %v294 = vsel %vm286, 1, 0
        %v295 = vsel %vm287, 1, 0
        %v296 = vsel %vm288, 1, 0
        %v297 = vsel %vm289, 1, 0
        %v298 = vsel %vm290, 1, 0
        %v299 = vsel %vm291, 1, 0
        %v300 = vsel %vm292, 1, 0
        %v301 = vcvt.s32.f32 %v293
        %v302 = vcvt.s32.f32 %v294
        %v303 = vcvt.s32.f32 %v295
        %v304 = vcvt.s32.f32 %v296
        %v305 = vcvt.s32.f32 %v297
        %v306 = vcvt.s32.f32 %v298
        %v307 = vcvt.s32.f32 %v299
        %v308 = vcvt.s32.f32 %v300
        %v309 = vlaneseq
        %v310 = vshrl.u32 %v309, 7
        %v311 = vadd.s32 %v310, 8
        %v312 = vsub.f32 1.0, %v301
        %v313 = vsub.f32 1.0, %v302
        %v314 = vsub.f32 1.0, %v303
        %v315 = vsub.f32 1.0, %v304
        %v316 = vsub.f32 1.0, %v305
        %v317 = vsub.f32 1.0, %v306
        %v318 = vsub.f32 1.0, %v307
        %v319 = vsub.f32 1.0, %v308
        %v320 = vsub.f32 1.0, %v263
        %v321 = vsub.f32 1.0, %v265
        %v322 = vsub.f32 1.0, %v267
        %v323 = vsub.f32 1.0, %v269
        %v324 = vsub.f32 1.0, %v271
        %v325 = vsub.f32 1.0, %v273
        %v326 = vsub.f32 1.0, %v275
        %v327 = vsub.f32 1.0, %v277
        %vm336 = vcmask 1046528
        %v337 = vrot.slane %v312, 1
        %v338 = vrot.slane %v313, 1
        %v339 = vsel %vm336, %v337, %v338
        %v340 = vrot.slane %v314, 1
        %v341 = vsel %vm336, %v338, %v340
        %v342 = vrot.slane %v315, 1
        %v343 = vsel %vm336, %v340, %v342
        %v344 = vrot.slane %v316, 1
        %v345 = vsel %vm336, %v342, %v344
        %v346 = vrot.slane %v317, 1
        %v347 = vsel %vm336, %v344, %v346
        %v348 = vrot.slane %v318, 1
        %v349 = vsel %vm336, %v346, %v348
        %v350 = vrot.slane %v319, 1
        %v351 = vsel %vm336, %v348, %v350
        %v360 = vsel %vm336, %v350, 0.0
        %vm361 = vcmask 1040384
        %v362 = vrot.slane %v312, 7
        %v363 = vrot.slane %v313, 7
        %v364 = vsel %vm361, %v362, %v363
        %v365 = vrot.slane %v314, 7
        %v366 = vsel %vm361, %v363, %v365
        %v367 = vrot.slane %v315, 7
        %v368 = vsel %vm361, %v365, %v367
        %v369 = vrot.slane %v316, 7
        %v370 = vsel %vm361, %v367, %v369
        %v371 = vrot.slane %v317, 7
        %v372 = vsel %vm361, %v369, %v371
        %v373 = vrot.slane %v318, 7
        %v374 = vsel %vm361, %v371, %v373
        %v375 = vrot.slane %v319, 7
        %v376 = vsel %vm361, %v373, %v375
        %v385 = vsel %vm361, 0.0, %v362
        %vm386 = vcmp.lt.s32.totalorder %v310, 15
        %vm387 = vcmp.lt.s32.totalorder %v311, 15
        %v388 = vsel %vm386, %v339, 0.0
        %v389 = vsel %vm387, %v341, 0.0
        %v390 = vsel %vm386, %v343, 0.0
        %v391 = vsel %vm387, %v345, 0.0
        %v392 = vsel %vm386, %v347, 0.0
        %v393 = vsel %vm387, %v349, 0.0
        %v394 = vsel %vm386, %v351, 0.0
        %v395 = vsel %vm387, %v360, 0.0
        %vm396 = vcmp.ge.s32.totalorder %v310, 1
        %vm397 = vcmp.ge.s32.totalorder %v311, 1
        %v398 = vsel %vm396, %v385, 0.0
        %v399 = vsel %vm397, %v364, 0.0
        %v400 = vsel %vm396, %v366, 0.0
        %v401 = vsel %vm397, %v368, 0.0
        %v402 = vsel %vm396, %v370, 0.0
        %v403 = vsel %vm397, %v372, 0.0
        %v404 = vsel %vm396, %v374, 0.0
        %v405 = vsel %vm397, %v376, 0.0
        %v406 = vmax.f32 %v388, %v398
        %v407 = vmax.f32 %v389, %v399
        %v408 = vmax.f32 %v390, %v400
        %v409 = vmax.f32 %v391, %v401
        %v410 = vmax.f32 %v392, %v402
        %v411 = vmax.f32 %v393, %v403
        %v412 = vmax.f32 %v394, %v404
        %v413 = vmax.f32 %v395, %v405
        %v414 = vmax.f32 %v312, %v406
        %v415 = vmax.f32 %v313, %v407
        %v416 = vmax.f32 %v314, %v408
        %v417 = vmax.f32 %v315, %v409
        %v418 = vmax.f32 %v316, %v410
        %v419 = vmax.f32 %v317, %v411
        %v420 = vmax.f32 %v318, %v412
        %v421 = vmax.f32 %v319, %v413
        %430 = vrot.lane.b32.xlu0 %v414, 127
        %v431 = vpop.permute.xlu0 %430
        %432 = vrot.lane.b32.xlu0 %v415, 127
        %v433 = vpop.permute.xlu0 %432
        %434 = vrot.lane.b32.xlu0 %v416, 127
        %v435 = vpop.permute.xlu0 %434
        %436 = vrot.lane.b32.xlu0 %v417, 127
        %v437 = vpop.permute.xlu0 %436
        %438 = vrot.lane.b32.xlu0 %v418, 127
        %v439 = vpop.permute.xlu0 %438
        %440 = vrot.lane.b32.xlu0 %v419, 127
        %v441 = vpop.permute.xlu0 %440
        %442 = vrot.lane.b32.xlu0 %v420, 127
        %v443 = vpop.permute.xlu0 %442
        %444 = vrot.lane.b32.xlu0 %v421, 127
        %v445 = vpop.permute.xlu0 %444
        %vm454 = vcmask 121856
        %v455 = vsel %vm454, %v431, 0.0
        %v456 = vsel %vm454, %v433, 0.0
        %v457 = vsel %vm454, %v435, 0.0
        %v458 = vsel %vm454, %v437, 0.0
        %v459 = vsel %vm454, %v439, 0.0
        %v460 = vsel %vm454, %v441, 0.0
        %v461 = vsel %vm454, %v443, 0.0
        %v462 = vsel %vm454, %v445, 0.0
        %463 = vrot.lane.b32.xlu0 %v414, 1
        %v464 = vpop.permute.xlu0 %463
        %465 = vrot.lane.b32.xlu0 %v415, 1
        %v466 = vpop.permute.xlu0 %465
        %467 = vrot.lane.b32.xlu0 %v416, 1
        %v468 = vpop.permute.xlu0 %467
        %469 = vrot.lane.b32.xlu0 %v417, 1
        %v470 = vpop.permute.xlu0 %469
        %471 = vrot.lane.b32.xlu0 %v418, 1
        %v472 = vpop.permute.xlu0 %471
        %473 = vrot.lane.b32.xlu0 %v419, 1
        %v474 = vpop.permute.xlu0 %473
        %475 = vrot.lane.b32.xlu0 %v420, 1
        %v476 = vpop.permute.xlu0 %475
        %477 = vrot.lane.b32.xlu0 %v421, 1
        %v478 = vpop.permute.xlu0 %477
        %vm487 = vcmask 7168
        %v488 = vsel %vm487, 0.0, %v464
        %v489 = vsel %vm487, 0.0, %v466
        %v490 = vsel %vm487, 0.0, %v468
        %v491 = vsel %vm487, 0.0, %v470
        %v492 = vsel %vm487, 0.0, %v472
        %v493 = vsel %vm487, 0.0, %v474
        %v494 = vsel %vm487, 0.0, %v476
        %v495 = vsel %vm487, 0.0, %v478
        %v496 = vmax.f32 %v455, %v488
        %v497 = vmax.f32 %v456, %v489
        %v498 = vmax.f32 %v457, %v490
        %v499 = vmax.f32 %v458, %v491
        %v500 = vmax.f32 %v459, %v492
        %v501 = vmax.f32 %v460, %v493
        %v502 = vmax.f32 %v461, %v494
        %v503 = vmax.f32 %v462, %v495
        %v504 = vmax.f32 %v414, %v496
        %v505 = vmax.f32 %v415, %v497
        %v506 = vmax.f32 %v416, %v498
        %v507 = vmax.f32 %v417, %v499
        %v508 = vmax.f32 %v418, %v500
        %v509 = vmax.f32 %v419, %v501
        %v510 = vmax.f32 %v420, %v502
        %v511 = vmax.f32 %v421, %v503
        %v512 = vsub.f32 %v504, %v312
        %v513 = vsub.f32 %v505, %v313
        %v514 = vsub.f32 %v506, %v314
        %v515 = vsub.f32 %v507, %v315
        %v516 = vsub.f32 %v508, %v316
        %v517 = vsub.f32 %v509, %v317
        %v518 = vsub.f32 %v510, %v318
        %v519 = vsub.f32 %v511, %v319
        %v528 = vrot.slane %v320, 1
        %v529 = vrot.slane %v321, 1
        %v530 = vsel %vm336, %v528, %v529
        %v531 = vrot.slane %v322, 1
        %v532 = vsel %vm336, %v529, %v531
        %v533 = vrot.slane %v323, 1
        %v534 = vsel %vm336, %v531, %v533
        %v535 = vrot.slane %v324, 1
        %v536 = vsel %vm336, %v533, %v535
        %v537 = vrot.slane %v325, 1
        %v538 = vsel %vm336, %v535, %v537
        %v539 = vrot.slane %v326, 1
        %v540 = vsel %vm336, %v537, %v539
        %v541 = vrot.slane %v327, 1
        %v542 = vsel %vm336, %v539, %v541
        %v551 = vsel %vm336, %v541, 0.0
        %v552 = vrot.slane %v320, 7
        %v553 = vrot.slane %v321, 7
        %v554 = vsel %vm361, %v552, %v553
        %v555 = vrot.slane %v322, 7
        %v556 = vsel %vm361, %v553, %v555
        %v557 = vrot.slane %v323, 7
        %v558 = vsel %vm361, %v555, %v557
        %v559 = vrot.slane %v324, 7
        %v560 = vsel %vm361, %v557, %v559
        %v561 = vrot.slane %v325, 7
        %v562 = vsel %vm361, %v559, %v561
        %v563 = vrot.slane %v326, 7
        %v564 = vsel %vm361, %v561, %v563
        %v565 = vrot.slane %v327, 7
        %v566 = vsel %vm361, %v563, %v565
        %v575 = vsel %vm361, 0.0, %v552
        %v576 = vsel %vm386, %v530, 0.0
        %v577 = vsel %vm387, %v532, 0.0
        %v578 = vsel %vm386, %v534, 0.0
        %v579 = vsel %vm387, %v536, 0.0
        %v580 = vsel %vm386, %v538, 0.0
        %v581 = vsel %vm387, %v540, 0.0
        %v582 = vsel %vm386, %v542, 0.0
        %v583 = vsel %vm387, %v551, 0.0
        %v584 = vsel %vm396, %v575, 0.0
        %v585 = vsel %vm397, %v554, 0.0
        %v586 = vsel %vm396, %v556, 0.0
        %v587 = vsel %vm397, %v558, 0.0
        %v588 = vsel %vm396, %v560, 0.0
        %v589 = vsel %vm397, %v562, 0.0
        %v590 = vsel %vm396, %v564, 0.0
        %v591 = vsel %vm397, %v566, 0.0
        %v592 = vmax.f32 %v576, %v584
        %v593 = vmax.f32 %v577, %v585
        %v594 = vmax.f32 %v578, %v586
        %v595 = vmax.f32 %v579, %v587
        %v596 = vmax.f32 %v580, %v588
        %v597 = vmax.f32 %v581, %v589
        %v598 = vmax.f32 %v582, %v590
        %v599 = vmax.f32 %v583, %v591
        %v600 = vmax.f32 %v320, %v592
        %v601 = vmax.f32 %v321, %v593
        %v602 = vmax.f32 %v322, %v594
        %v603 = vmax.f32 %v323, %v595
        %v604 = vmax.f32 %v324, %v596
        %v605 = vmax.f32 %v325, %v597
        %v606 = vmax.f32 %v326, %v598
        %v607 = vmax.f32 %v327, %v599
        %616 = vrot.lane.b32.xlu0 %v600, 127
        %v617 = vpop.permute.xlu0 %616
        %618 = vrot.lane.b32.xlu0 %v601, 127
        %v619 = vpop.permute.xlu0 %618
        %620 = vrot.lane.b32.xlu0 %v602, 127
        %v621 = vpop.permute.xlu0 %620
        %622 = vrot.lane.b32.xlu0 %v603, 127
        %v623 = vpop.permute.xlu0 %622
        %624 = vrot.lane.b32.xlu0 %v604, 127
        %v625 = vpop.permute.xlu0 %624
        %626 = vrot.lane.b32.xlu0 %v605, 127
        %v627 = vpop.permute.xlu0 %626
        %628 = vrot.lane.b32.xlu0 %v606, 127
        %v629 = vpop.permute.xlu0 %628
        %630 = vrot.lane.b32.xlu0 %v607, 127
        %v631 = vpop.permute.xlu0 %630
        %v640 = vsel %vm454, %v617, 0.0
        %v641 = vsel %vm454, %v619, 0.0
        %v642 = vsel %vm454, %v621, 0.0
        %v643 = vsel %vm454, %v623, 0.0
        %v644 = vsel %vm454, %v625, 0.0
        %v645 = vsel %vm454, %v627, 0.0
        %v646 = vsel %vm454, %v629, 0.0
        %v647 = vsel %vm454, %v631, 0.0
        %648 = vrot.lane.b32.xlu0 %v600, 1
        %v649 = vpop.permute.xlu0 %648
        %650 = vrot.lane.b32.xlu0 %v601, 1
        %v651 = vpop.permute.xlu0 %650
        %652 = vrot.lane.b32.xlu0 %v602, 1
        %v653 = vpop.permute.xlu0 %652
        %654 = vrot.lane.b32.xlu0 %v603, 1
        %v655 = vpop.permute.xlu0 %654
        %656 = vrot.lane.b32.xlu0 %v604, 1
        %v657 = vpop.permute.xlu0 %656
        %658 = vrot.lane.b32.xlu0 %v605, 1
        %v659 = vpop.permute.xlu0 %658
        %660 = vrot.lane.b32.xlu0 %v606, 1
        %v661 = vpop.permute.xlu0 %660
        %662 = vrot.lane.b32.xlu0 %v607, 1
        %v663 = vpop.permute.xlu0 %662
        %v672 = vsel %vm487, 0.0, %v649
        %v673 = vsel %vm487, 0.0, %v651
        %v674 = vsel %vm487, 0.0, %v653
        %v675 = vsel %vm487, 0.0, %v655
        %v676 = vsel %vm487, 0.0, %v657
        %v677 = vsel %vm487, 0.0, %v659
        %v678 = vsel %vm487, 0.0, %v661
        %v679 = vsel %vm487, 0.0, %v663
        %v680 = vmax.f32 %v640, %v672
        %v681 = vmax.f32 %v641, %v673
        %v682 = vmax.f32 %v642, %v674
        %v683 = vmax.f32 %v643, %v675
        %v684 = vmax.f32 %v644, %v676
        %v685 = vmax.f32 %v645, %v677
        %v686 = vmax.f32 %v646, %v678
        %v687 = vmax.f32 %v647, %v679
        %v688 = vmax.f32 %v600, %v680
        %v689 = vmax.f32 %v601, %v681
        %v690 = vmax.f32 %v602, %v682
        %v691 = vmax.f32 %v603, %v683
        %v692 = vmax.f32 %v604, %v684
        %v693 = vmax.f32 %v605, %v685
        %v694 = vmax.f32 %v606, %v686
        %v695 = vmax.f32 %v607, %v687
        %v696 = vsub.f32 %v688, %v320
        %v697 = vsub.f32 %v689, %v321
        %v698 = vsub.f32 %v690, %v322
        %v699 = vsub.f32 %v691, %v323
        %v700 = vsub.f32 %v692, %v324
        %v701 = vsub.f32 %v693, %v325
        %v702 = vsub.f32 %v694, %v326
        %v703 = vsub.f32 %v695, %v327
        %v712 = vrot.slane %v512, 1
        %v713 = vrot.slane %v513, 1
        %v714 = vsel %vm336, %v712, %v713
        %v715 = vrot.slane %v514, 1
        %v716 = vsel %vm336, %v713, %v715
        %v717 = vrot.slane %v515, 1
        %v718 = vsel %vm336, %v715, %v717
        %v719 = vrot.slane %v516, 1
        %v720 = vsel %vm336, %v717, %v719
        %v721 = vrot.slane %v517, 1
        %v722 = vsel %vm336, %v719, %v721
        %v723 = vrot.slane %v518, 1
        %v724 = vsel %vm336, %v721, %v723
        %v725 = vrot.slane %v519, 1
        %v726 = vsel %vm336, %v723, %v725
        %v735 = vsel %vm336, %v725, 0.0
        %v736 = vrot.slane %v512, 7
        %v737 = vrot.slane %v513, 7
        %v738 = vsel %vm361, %v736, %v737
        %v739 = vrot.slane %v514, 7
        %v740 = vsel %vm361, %v737, %v739
        %v741 = vrot.slane %v515, 7
        %v742 = vsel %vm361, %v739, %v741
        %v743 = vrot.slane %v516, 7
        %v744 = vsel %vm361, %v741, %v743
        %v745 = vrot.slane %v517, 7
        %v746 = vsel %vm361, %v743, %v745
        %v747 = vrot.slane %v518, 7
        %v748 = vsel %vm361, %v745, %v747
        %v749 = vrot.slane %v519, 7
        %v750 = vsel %vm361, %v747, %v749
        %v759 = vsel %vm361, 0.0, %v736
        %v760 = vsel %vm386, %v714, 0.0
        %v761 = vsel %vm387, %v716, 0.0
        %v762 = vsel %vm386, %v718, 0.0
        %v763 = vsel %vm387, %v720, 0.0
        %v764 = vsel %vm386, %v722, 0.0
        %v765 = vsel %vm387, %v724, 0.0
        %v766 = vsel %vm386, %v726, 0.0
        %v767 = vsel %vm387, %v735, 0.0
        %v768 = vsel %vm396, %v759, 0.0
        %v769 = vsel %vm397, %v738, 0.0
        %v770 = vsel %vm396, %v740, 0.0
        %v771 = vsel %vm397, %v742, 0.0
        %v772 = vsel %vm396, %v744, 0.0
        %v773 = vsel %vm397, %v746, 0.0
        %v774 = vsel %vm396, %v748, 0.0
        %v775 = vsel %vm397, %v750, 0.0
        %v776 = vmax.f32 %v760, %v768
        %v777 = vmax.f32 %v761, %v769
        %v778 = vmax.f32 %v762, %v770
        %v779 = vmax.f32 %v763, %v771
        %v780 = vmax.f32 %v764, %v772
        %v781 = vmax.f32 %v765, %v773
        %v782 = vmax.f32 %v766, %v774
        %v783 = vmax.f32 %v767, %v775
        %v784 = vmax.f32 %v512, %v776
        %v785 = vmax.f32 %v513, %v777
        %v786 = vmax.f32 %v514, %v778
        %v787 = vmax.f32 %v515, %v779
        %v788 = vmax.f32 %v516, %v780
        %v789 = vmax.f32 %v517, %v781
        %v790 = vmax.f32 %v518, %v782
        %v791 = vmax.f32 %v519, %v783
        %vm792 = vcmask 1045504
        %v793 = vrot.slane %v512, 2
        %v794 = vrot.slane %v513, 2
        %v795 = vsel %vm792, %v793, %v794
        %v796 = vrot.slane %v514, 2
        %v797 = vsel %vm792, %v794, %v796
        %v798 = vrot.slane %v515, 2
        %v799 = vsel %vm792, %v796, %v798
        %v800 = vrot.slane %v516, 2
        %v801 = vsel %vm792, %v798, %v800
        %v802 = vrot.slane %v517, 2
        %v803 = vsel %vm792, %v800, %v802
        %v804 = vrot.slane %v518, 2
        %v805 = vsel %vm792, %v802, %v804
        %v806 = vrot.slane %v519, 2
        %v807 = vsel %vm792, %v804, %v806
        %v816 = vsel %vm792, %v806, 0.0
        %vm817 = vcmask 1041408
        %v818 = vrot.slane %v512, 6
        %v819 = vrot.slane %v513, 6
        %v820 = vsel %vm817, %v818, %v819
        %v821 = vrot.slane %v514, 6
        %v822 = vsel %vm817, %v819, %v821
        %v823 = vrot.slane %v515, 6
        %v824 = vsel %vm817, %v821, %v823
        %v825 = vrot.slane %v516, 6
        %v826 = vsel %vm817, %v823, %v825
        %v827 = vrot.slane %v517, 6
        %v828 = vsel %vm817, %v825, %v827
        %v829 = vrot.slane %v518, 6
        %v830 = vsel %vm817, %v827, %v829
        %v831 = vrot.slane %v519, 6
        %v832 = vsel %vm817, %v829, %v831
        %v841 = vsel %vm817, 0.0, %v818
        %vm842 = vcmp.lt.s32.totalorder %v310, 14
        %vm843 = vcmp.lt.s32.totalorder %v311, 14
        %v844 = vsel %vm842, %v795, 0.0
        %v845 = vsel %vm843, %v797, 0.0
        %v846 = vsel %vm842, %v799, 0.0
        %v847 = vsel %vm843, %v801, 0.0
        %v848 = vsel %vm842, %v803, 0.0
        %v849 = vsel %vm843, %v805, 0.0
        %v850 = vsel %vm842, %v807, 0.0
        %v851 = vsel %vm843, %v816, 0.0
        %vm852 = vcmp.ge.s32.totalorder %v310, 2
        %vm853 = vcmp.ge.s32.totalorder %v311, 2
        %v854 = vsel %vm852, %v841, 0.0
        %v855 = vsel %vm853, %v820, 0.0
        %v856 = vsel %vm852, %v822, 0.0
        %v857 = vsel %vm853, %v824, 0.0
        %v858 = vsel %vm852, %v826, 0.0
        %v859 = vsel %vm853, %v828, 0.0
        %v860 = vsel %vm852, %v830, 0.0
        %v861 = vsel %vm853, %v832, 0.0
        %v862 = vmax.f32 %v844, %v854
        %v863 = vmax.f32 %v845, %v855
        %v864 = vmax.f32 %v846, %v856
        %v865 = vmax.f32 %v847, %v857
        %v866 = vmax.f32 %v848, %v858
        %v867 = vmax.f32 %v849, %v859
        %v868 = vmax.f32 %v850, %v860
        %v869 = vmax.f32 %v851, %v861
        %v870 = vmax.f32 %v784, %v862
        %v871 = vmax.f32 %v785, %v863
        %v872 = vmax.f32 %v786, %v864
        %v873 = vmax.f32 %v787, %v865
        %v874 = vmax.f32 %v788, %v866
        %v875 = vmax.f32 %v789, %v867
        %v876 = vmax.f32 %v790, %v868
        %v877 = vmax.f32 %v791, %v869
        %886 = vrot.lane.b32.xlu0 %v870, 127
        %v887 = vpop.permute.xlu0 %886
        %888 = vrot.lane.b32.xlu0 %v871, 127
        %v889 = vpop.permute.xlu0 %888
        %890 = vrot.lane.b32.xlu0 %v872, 127
        %v891 = vpop.permute.xlu0 %890
        %892 = vrot.lane.b32.xlu0 %v873, 127
        %v893 = vpop.permute.xlu0 %892
        %894 = vrot.lane.b32.xlu0 %v874, 127
        %v895 = vpop.permute.xlu0 %894
        %896 = vrot.lane.b32.xlu0 %v875, 127
        %v897 = vpop.permute.xlu0 %896
        %898 = vrot.lane.b32.xlu0 %v876, 127
        %v899 = vpop.permute.xlu0 %898
        %900 = vrot.lane.b32.xlu0 %v877, 127
        %v901 = vpop.permute.xlu0 %900
        %v910 = vsel %vm454, %v887, 0.0
        %v911 = vsel %vm454, %v889, 0.0
        %v912 = vsel %vm454, %v891, 0.0
        %v913 = vsel %vm454, %v893, 0.0
        %v914 = vsel %vm454, %v895, 0.0
        %v915 = vsel %vm454, %v897, 0.0
        %v916 = vsel %vm454, %v899, 0.0
        %v917 = vsel %vm454, %v901, 0.0
        %918 = vrot.lane.b32.xlu0 %v870, 1
        %v919 = vpop.permute.xlu0 %918
        %920 = vrot.lane.b32.xlu0 %v871, 1
        %v921 = vpop.permute.xlu0 %920
        %922 = vrot.lane.b32.xlu0 %v872, 1
        %v923 = vpop.permute.xlu0 %922
        %924 = vrot.lane.b32.xlu0 %v873, 1
        %v925 = vpop.permute.xlu0 %924
        %926 = vrot.lane.b32.xlu0 %v874, 1
        %v927 = vpop.permute.xlu0 %926
        %928 = vrot.lane.b32.xlu0 %v875, 1
        %v929 = vpop.permute.xlu0 %928
        %930 = vrot.lane.b32.xlu0 %v876, 1
        %v931 = vpop.permute.xlu0 %930
        %932 = vrot.lane.b32.xlu0 %v877, 1
        %v933 = vpop.permute.xlu0 %932
        %v942 = vsel %vm487, 0.0, %v919
        %v943 = vsel %vm487, 0.0, %v921
        %v944 = vsel %vm487, 0.0, %v923
        %v945 = vsel %vm487, 0.0, %v925
        %v946 = vsel %vm487, 0.0, %v927
        %v947 = vsel %vm487, 0.0, %v929
        %v948 = vsel %vm487, 0.0, %v931
        %v949 = vsel %vm487, 0.0, %v933
        %v950 = vmax.f32 %v910, %v942
        %v951 = vmax.f32 %v911, %v943
        %v952 = vmax.f32 %v912, %v944
        %v953 = vmax.f32 %v913, %v945
        %v954 = vmax.f32 %v914, %v946
        %v955 = vmax.f32 %v915, %v947
        %v956 = vmax.f32 %v916, %v948
        %v957 = vmax.f32 %v917, %v949
        %v958 = vmax.f32 %v870, %v950
        %v959 = vmax.f32 %v871, %v951
        %v960 = vmax.f32 %v872, %v952
        %v961 = vmax.f32 %v873, %v953
        %v962 = vmax.f32 %v874, %v954
        %v963 = vmax.f32 %v875, %v955
        %v964 = vmax.f32 %v876, %v956
        %v965 = vmax.f32 %v877, %v957
        %966 = vrot.lane.b32.xlu0 %v870, 126
        %v967 = vpop.permute.xlu0 %966
        %968 = vrot.lane.b32.xlu0 %v871, 126
        %v969 = vpop.permute.xlu0 %968
        %970 = vrot.lane.b32.xlu0 %v872, 126
        %v971 = vpop.permute.xlu0 %970
        %972 = vrot.lane.b32.xlu0 %v873, 126
        %v973 = vpop.permute.xlu0 %972
        %974 = vrot.lane.b32.xlu0 %v874, 126
        %v975 = vpop.permute.xlu0 %974
        %976 = vrot.lane.b32.xlu0 %v875, 126
        %v977 = vpop.permute.xlu0 %976
        %978 = vrot.lane.b32.xlu0 %v876, 126
        %v979 = vpop.permute.xlu0 %978
        %980 = vrot.lane.b32.xlu0 %v877, 126
        %v981 = vpop.permute.xlu0 %980
        %vm990 = vcmask 113664
        %v991 = vsel %vm990, %v967, 0.0
        %v992 = vsel %vm990, %v969, 0.0
        %v993 = vsel %vm990, %v971, 0.0
        %v994 = vsel %vm990, %v973, 0.0
        %v995 = vsel %vm990, %v975, 0.0
        %v996 = vsel %vm990, %v977, 0.0
        %v997 = vsel %vm990, %v979, 0.0
        %v998 = vsel %vm990, %v981, 0.0
        %999 = vrot.lane.b32.xlu0 %v870, 2
        %v1000 = vpop.permute.xlu0 %999
        %1001 = vrot.lane.b32.xlu0 %v871, 2
        %v1002 = vpop.permute.xlu0 %1001
        %1003 = vrot.lane.b32.xlu0 %v872, 2
        %v1004 = vpop.permute.xlu0 %1003
        %1005 = vrot.lane.b32.xlu0 %v873, 2
        %v1006 = vpop.permute.xlu0 %1005
        %1007 = vrot.lane.b32.xlu0 %v874, 2
        %v1008 = vpop.permute.xlu0 %1007
        %1009 = vrot.lane.b32.xlu0 %v875, 2
        %v1010 = vpop.permute.xlu0 %1009
        %1011 = vrot.lane.b32.xlu0 %v876, 2
        %v1012 = vpop.permute.xlu0 %1011
        %1013 = vrot.lane.b32.xlu0 %v877, 2
        %v1014 = vpop.permute.xlu0 %1013
        %vm1023 = vcmask 15360
        %v1024 = vsel %vm1023, 0.0, %v1000
        %v1025 = vsel %vm1023, 0.0, %v1002
        %v1026 = vsel %vm1023, 0.0, %v1004
        %v1027 = vsel %vm1023, 0.0, %v1006
        %v1028 = vsel %vm1023, 0.0, %v1008
        %v1029 = vsel %vm1023, 0.0, %v1010
        %v1030 = vsel %vm1023, 0.0, %v1012
        %v1031 = vsel %vm1023, 0.0, %v1014
        %v1032 = vmax.f32 %v991, %v1024
        %v1033 = vmax.f32 %v992, %v1025
        %v1034 = vmax.f32 %v993, %v1026
        %v1035 = vmax.f32 %v994, %v1027
        %v1036 = vmax.f32 %v995, %v1028
        %v1037 = vmax.f32 %v996, %v1029
        %v1038 = vmax.f32 %v997, %v1030
        %v1039 = vmax.f32 %v998, %v1031
        %v1040 = vmax.f32 %v958, %v1032
        %v1041 = vmax.f32 %v959, %v1033
        %v1042 = vmax.f32 %v960, %v1034
        %v1043 = vmax.f32 %v961, %v1035
        %v1044 = vmax.f32 %v962, %v1036
        %v1045 = vmax.f32 %v963, %v1037
        %v1046 = vmax.f32 %v964, %v1038
        %v1047 = vmax.f32 %v965, %v1039
        %v1056 = vrot.slane %v696, 1
        %v1057 = vrot.slane %v697, 1
        %v1058 = vsel %vm336, %v1056, %v1057
        %v1059 = vrot.slane %v698, 1
        %v1060 = vsel %vm336, %v1057, %v1059
        %v1061 = vrot.slane %v699, 1
        %v1062 = vsel %vm336, %v1059, %v1061
        %v1063 = vrot.slane %v700, 1
        %v1064 = vsel %vm336, %v1061, %v1063
        %v1065 = vrot.slane %v701, 1
        %v1066 = vsel %vm336, %v1063, %v1065
        %v1067 = vrot.slane %v702, 1
        %v1068 = vsel %vm336, %v1065, %v1067
        %v1069 = vrot.slane %v703, 1
        %v1070 = vsel %vm336, %v1067, %v1069
        %v1079 = vsel %vm336, %v1069, 0.0
        %v1080 = vrot.slane %v696, 7
        %v1081 = vrot.slane %v697, 7
        %v1082 = vsel %vm361, %v1080, %v1081
        %v1083 = vrot.slane %v698, 7
        %v1084 = vsel %vm361, %v1081, %v1083
        %v1085 = vrot.slane %v699, 7
        %v1086 = vsel %vm361, %v1083, %v1085
        %v1087 = vrot.slane %v700, 7
        %v1088 = vsel %vm361, %v1085, %v1087
        %v1089 = vrot.slane %v701, 7
        %v1090 = vsel %vm361, %v1087, %v1089
        %v1091 = vrot.slane %v702, 7
        %v1092 = vsel %vm361, %v1089, %v1091
        %v1093 = vrot.slane %v703, 7
        %v1094 = vsel %vm361, %v1091, %v1093
        %v1103 = vsel %vm361, 0.0, %v1080
        %v1104 = vsel %vm386, %v1058, 0.0
        %v1105 = vsel %vm387, %v1060, 0.0
        %v1106 = vsel %vm386, %v1062, 0.0
        %v1107 = vsel %vm387, %v1064, 0.0
        %v1108 = vsel %vm386, %v1066, 0.0
        %v1109 = vsel %vm387, %v1068, 0.0
        %v1110 = vsel %vm386, %v1070, 0.0
        %v1111 = vsel %vm387, %v1079, 0.0
        %v1112 = vsel %vm396, %v1103, 0.0
        %v1113 = vsel %vm397, %v1082, 0.0
        %v1114 = vsel %vm396, %v1084, 0.0
        %v1115 = vsel %vm397, %v1086, 0.0
        %v1116 = vsel %vm396, %v1088, 0.0
        %v1117 = vsel %vm397, %v1090, 0.0
        %v1118 = vsel %vm396, %v1092, 0.0
        %v1119 = vsel %vm397, %v1094, 0.0
        %v1120 = vmax.f32 %v1104, %v1112
        %v1121 = vmax.f32 %v1105, %v1113
        %v1122 = vmax.f32 %v1106, %v1114
        %v1123 = vmax.f32 %v1107, %v1115
        %v1124 = vmax.f32 %v1108, %v1116
        %v1125 = vmax.f32 %v1109, %v1117
        %v1126 = vmax.f32 %v1110, %v1118
        %v1127 = vmax.f32 %v1111, %v1119
        %v1128 = vmax.f32 %v696, %v1120
        %v1129 = vmax.f32 %v697, %v1121
        %v1130 = vmax.f32 %v698, %v1122
        %v1131 = vmax.f32 %v699, %v1123
        %v1132 = vmax.f32 %v700, %v1124
        %v1133 = vmax.f32 %v701, %v1125
        %v1134 = vmax.f32 %v702, %v1126
        %v1135 = vmax.f32 %v703, %v1127
        %v1136 = vrot.slane %v696, 2
        %v1137 = vrot.slane %v697, 2
        %v1138 = vsel %vm792, %v1136, %v1137
        %v1139 = vrot.slane %v698, 2
        %v1140 = vsel %vm792, %v1137, %v1139
        %v1141 = vrot.slane %v699, 2
        %v1142 = vsel %vm792, %v1139, %v1141
        %v1143 = vrot.slane %v700, 2
        %v1144 = vsel %vm792, %v1141, %v1143
        %v1145 = vrot.slane %v701, 2
        %v1146 = vsel %vm792, %v1143, %v1145
        %v1147 = vrot.slane %v702, 2
        %v1148 = vsel %vm792, %v1145, %v1147
        %v1149 = vrot.slane %v703, 2
        %v1150 = vsel %vm792, %v1147, %v1149
        %v1159 = vsel %vm792, %v1149, 0.0
        %v1160 = vrot.slane %v696, 6
        %v1161 = vrot.slane %v697, 6
        %v1162 = vsel %vm817, %v1160, %v1161
        %v1163 = vrot.slane %v698, 6
        %v1164 = vsel %vm817, %v1161, %v1163
        %v1165 = vrot.slane %v699, 6
        %v1166 = vsel %vm817, %v1163, %v1165
        %v1167 = vrot.slane %v700, 6
        %v1168 = vsel %vm817, %v1165, %v1167
        %v1169 = vrot.slane %v701, 6
        %v1170 = vsel %vm817, %v1167, %v1169
        %v1171 = vrot.slane %v702, 6
        %v1172 = vsel %vm817, %v1169, %v1171
        %v1173 = vrot.slane %v703, 6
        %v1174 = vsel %vm817, %v1171, %v1173
        %v1183 = vsel %vm817, 0.0, %v1160
        %v1184 = vsel %vm842, %v1138, 0.0
        %v1185 = vsel %vm843, %v1140, 0.0
        %v1186 = vsel %vm842, %v1142, 0.0
        %v1187 = vsel %vm843, %v1144, 0.0
        %v1188 = vsel %vm842, %v1146, 0.0
        %v1189 = vsel %vm843, %v1148, 0.0
        %v1190 = vsel %vm842, %v1150, 0.0
        %v1191 = vsel %vm843, %v1159, 0.0
        %v1192 = vsel %vm852, %v1183, 0.0
        %v1193 = vsel %vm853, %v1162, 0.0
        %v1194 = vsel %vm852, %v1164, 0.0
        %v1195 = vsel %vm853, %v1166, 0.0
        %v1196 = vsel %vm852, %v1168, 0.0
        %v1197 = vsel %vm853, %v1170, 0.0
        %v1198 = vsel %vm852, %v1172, 0.0
        %v1199 = vsel %vm853, %v1174, 0.0
        %v1200 = vmax.f32 %v1184, %v1192
        %v1201 = vmax.f32 %v1185, %v1193
        %v1202 = vmax.f32 %v1186, %v1194
        %v1203 = vmax.f32 %v1187, %v1195
        %v1204 = vmax.f32 %v1188, %v1196
        %v1205 = vmax.f32 %v1189, %v1197
        %v1206 = vmax.f32 %v1190, %v1198
        %v1207 = vmax.f32 %v1191, %v1199
        %v1208 = vmax.f32 %v1128, %v1200
        %v1209 = vmax.f32 %v1129, %v1201
        %v1210 = vmax.f32 %v1130, %v1202
        %v1211 = vmax.f32 %v1131, %v1203
        %v1212 = vmax.f32 %v1132, %v1204
        %v1213 = vmax.f32 %v1133, %v1205
        %v1214 = vmax.f32 %v1134, %v1206
        %v1215 = vmax.f32 %v1135, %v1207
        %1224 = vrot.lane.b32.xlu0 %v1208, 127
        %v1225 = vpop.permute.xlu0 %1224
        %1226 = vrot.lane.b32.xlu0 %v1209, 127
        %v1227 = vpop.permute.xlu0 %1226
        %1228 = vrot.lane.b32.xlu0 %v1210, 127
        %v1229 = vpop.permute.xlu0 %1228
        %1230 = vrot.lane.b32.xlu0 %v1211, 127
        %v1231 = vpop.permute.xlu0 %1230
        %1232 = vrot.lane.b32.xlu0 %v1212, 127
        %v1233 = vpop.permute.xlu0 %1232
        %1234 = vrot.lane.b32.xlu0 %v1213, 127
        %v1235 = vpop.permute.xlu0 %1234
        %1236 = vrot.lane.b32.xlu0 %v1214, 127
        %v1237 = vpop.permute.xlu0 %1236
        %1238 = vrot.lane.b32.xlu0 %v1215, 127
        %v1239 = vpop.permute.xlu0 %1238
        %v1248 = vsel %vm454, %v1225, 0.0
        %v1249 = vsel %vm454, %v1227, 0.0
        %v1250 = vsel %vm454, %v1229, 0.0
        %v1251 = vsel %vm454, %v1231, 0.0
        %v1252 = vsel %vm454, %v1233, 0.0
        %v1253 = vsel %vm454, %v1235, 0.0
        %v1254 = vsel %vm454, %v1237, 0.0
        %v1255 = vsel %vm454, %v1239, 0.0
        %1256 = vrot.lane.b32.xlu0 %v1208, 1
        %v1257 = vpop.permute.xlu0 %1256
        %1258 = vrot.lane.b32.xlu0 %v1209, 1
        %v1259 = vpop.permute.xlu0 %1258
        %1260 = vrot.lane.b32.xlu0 %v1210, 1
        %v1261 = vpop.permute.xlu0 %1260
        %1262 = vrot.lane.b32.xlu0 %v1211, 1
        %v1263 = vpop.permute.xlu0 %1262
        %1264 = vrot.lane.b32.xlu0 %v1212, 1
        %v1265 = vpop.permute.xlu0 %1264
        %1266 = vrot.lane.b32.xlu0 %v1213, 1
        %v1267 = vpop.permute.xlu0 %1266
        %1268 = vrot.lane.b32.xlu0 %v1214, 1
        %v1269 = vpop.permute.xlu0 %1268
        %1270 = vrot.lane.b32.xlu0 %v1215, 1
        %v1271 = vpop.permute.xlu0 %1270
        %v1280 = vsel %vm487, 0.0, %v1257
        %v1281 = vsel %vm487, 0.0, %v1259
        %v1282 = vsel %vm487, 0.0, %v1261
        %v1283 = vsel %vm487, 0.0, %v1263
        %v1284 = vsel %vm487, 0.0, %v1265
        %v1285 = vsel %vm487, 0.0, %v1267
        %v1286 = vsel %vm487, 0.0, %v1269
        %v1287 = vsel %vm487, 0.0, %v1271
        %v1288 = vmax.f32 %v1248, %v1280
        %v1289 = vmax.f32 %v1249, %v1281
        %v1290 = vmax.f32 %v1250, %v1282
        %v1291 = vmax.f32 %v1251, %v1283
        %v1292 = vmax.f32 %v1252, %v1284
        %v1293 = vmax.f32 %v1253, %v1285
        %v1294 = vmax.f32 %v1254, %v1286
        %v1295 = vmax.f32 %v1255, %v1287
        %v1296 = vmax.f32 %v1208, %v1288
        %v1297 = vmax.f32 %v1209, %v1289
        %v1298 = vmax.f32 %v1210, %v1290
        %v1299 = vmax.f32 %v1211, %v1291
        %v1300 = vmax.f32 %v1212, %v1292
        %v1301 = vmax.f32 %v1213, %v1293
        %v1302 = vmax.f32 %v1214, %v1294
        %v1303 = vmax.f32 %v1215, %v1295
        %1304 = vrot.lane.b32.xlu0 %v1208, 126
        %v1305 = vpop.permute.xlu0 %1304
        %1306 = vrot.lane.b32.xlu0 %v1209, 126
        %v1307 = vpop.permute.xlu0 %1306
        %1308 = vrot.lane.b32.xlu0 %v1210, 126
        %v1309 = vpop.permute.xlu0 %1308
        %1310 = vrot.lane.b32.xlu0 %v1211, 126
        %v1311 = vpop.permute.xlu0 %1310
        %1312 = vrot.lane.b32.xlu0 %v1212, 126
        %v1313 = vpop.permute.xlu0 %1312
        %1314 = vrot.lane.b32.xlu0 %v1213, 126
        %v1315 = vpop.permute.xlu0 %1314
        %1316 = vrot.lane.b32.xlu0 %v1214, 126
        %v1317 = vpop.permute.xlu0 %1316
        %1318 = vrot.lane.b32.xlu0 %v1215, 126
        %v1319 = vpop.permute.xlu0 %1318
        %v1328 = vsel %vm990, %v1305, 0.0
        %v1329 = vsel %vm990, %v1307, 0.0
        %v1330 = vsel %vm990, %v1309, 0.0
        %v1331 = vsel %vm990, %v1311, 0.0
        %v1332 = vsel %vm990, %v1313, 0.0
        %v1333 = vsel %vm990, %v1315, 0.0
        %v1334 = vsel %vm990, %v1317, 0.0
        %v1335 = vsel %vm990, %v1319, 0.0
        %1336 = vrot.lane.b32.xlu0 %v1208, 2
        %v1337 = vpop.permute.xlu0 %1336
        %1338 = vrot.lane.b32.xlu0 %v1209, 2
        %v1339 = vpop.permute.xlu0 %1338
        %1340 = vrot.lane.b32.xlu0 %v1210, 2
        %v1341 = vpop.permute.xlu0 %1340
        %1342 = vrot.lane.b32.xlu0 %v1211, 2
        %v1343 = vpop.permute.xlu0 %1342
        %1344 = vrot.lane.b32.xlu0 %v1212, 2
        %v1345 = vpop.permute.xlu0 %1344
        %1346 = vrot.lane.b32.xlu0 %v1213, 2
        %v1347 = vpop.permute.xlu0 %1346
        %1348 = vrot.lane.b32.xlu0 %v1214, 2
        %v1349 = vpop.permute.xlu0 %1348
        %1350 = vrot.lane.b32.xlu0 %v1215, 2
        %v1351 = vpop.permute.xlu0 %1350
        %v1360 = vsel %vm1023, 0.0, %v1337
        %v1361 = vsel %vm1023, 0.0, %v1339
        %v1362 = vsel %vm1023, 0.0, %v1341
        %v1363 = vsel %vm1023, 0.0, %v1343
        %v1364 = vsel %vm1023, 0.0, %v1345
        %v1365 = vsel %vm1023, 0.0, %v1347
        %v1366 = vsel %vm1023, 0.0, %v1349
        %v1367 = vsel %vm1023, 0.0, %v1351
        %v1368 = vmax.f32 %v1328, %v1360
        %v1369 = vmax.f32 %v1329, %v1361
        %v1370 = vmax.f32 %v1330, %v1362
        %v1371 = vmax.f32 %v1331, %v1363
        %v1372 = vmax.f32 %v1332, %v1364
        %v1373 = vmax.f32 %v1333, %v1365
        %v1374 = vmax.f32 %v1334, %v1366
        %v1375 = vmax.f32 %v1335, %v1367
        %v1376 = vmax.f32 %v1296, %v1368
        %v1377 = vmax.f32 %v1297, %v1369
        %v1378 = vmax.f32 %v1298, %v1370
        %v1379 = vmax.f32 %v1299, %v1371
        %v1380 = vmax.f32 %v1300, %v1372
        %v1381 = vmax.f32 %v1301, %v1373
        %v1382 = vmax.f32 %v1302, %v1374
        %v1383 = vmax.f32 %v1303, %v1375
        %v1384 = vmul.f32 %v696, %v1040
        %v1385 = vmul.f32 %v697, %v1041
        %v1386 = vmul.f32 %v698, %v1042
        %v1387 = vmul.f32 %v699, %v1043
        %v1388 = vmul.f32 %v700, %v1044
        %v1389 = vmul.f32 %v701, %v1045
        %v1390 = vmul.f32 %v702, %v1046
        %v1391 = vmul.f32 %v703, %v1047
        %vm1392 = vcmask 130048
        %v1393 = vsel %vm1392, %v1384, 0.0
        %1394 = vadd.xlane.f32.xlu0 %v1393
        %v1395 = vpop.xlane.xlu0 %1394
        %v1396 = vsel %vm1392, %v1385, 0.0
        %1397 = vadd.xlane.f32.xlu0 %v1396
        %v1398 = vpop.xlane.xlu0 %1397
        %v1399 = vsel %vm1392, %v1386, 0.0
        %1400 = vadd.xlane.f32.xlu0 %v1399
        %v1401 = vpop.xlane.xlu0 %1400
        %v1402 = vsel %vm1392, %v1387, 0.0
        %1403 = vadd.xlane.f32.xlu0 %v1402
        %v1404 = vpop.xlane.xlu0 %1403
        %v1405 = vsel %vm1392, %v1388, 0.0
        %1406 = vadd.xlane.f32.xlu0 %v1405
        %v1407 = vpop.xlane.xlu0 %1406
        %v1408 = vsel %vm1392, %v1389, 0.0
        %1409 = vadd.xlane.f32.xlu0 %v1408
        %v1410 = vpop.xlane.xlu0 %1409
        %v1411 = vsel %vm1392, %v1390, 0.0
        %1412 = vadd.xlane.f32.xlu0 %v1411
        %v1413 = vpop.xlane.xlu0 %1412
        %v1414 = vsel %vm1392, %v1391, 0.0
        %1415 = vadd.xlane.f32.xlu0 %v1414
        %v1416 = vpop.xlane.xlu0 %1415
        %v1425 = vlaneseq
        %v1426 = vand.u32 %v1425, 127
        %v1427 = vlaneseq
        %v1428 = vshrl.u32 %v1427, 7
        %v1429 = vsub.s32 %v1426, %v1428
        %v1430 = vrot.slane %v1395, %v1429
        %v1431 = vadd.s32 %v1426, 4294967288
        %v1432 = vlaneseq
        %v1433 = vshrl.u32 %v1432, 7
        %v1434 = vsub.s32 %v1431, %v1433
        %v1435 = vrot.slane %v1398, %v1434
        %vm1436 = vcmask 130112
        %v1437 = vsel %vm1436, %v1435, %v1430
        %v1438 = vlaneseq
        %v1439 = vshrl.u32 %v1438, 7
        %v1440 = vsub.s32 %v1426, %v1439
        %v1441 = vrot.slane %v1401, %v1440
        %v1442 = vlaneseq
        %v1443 = vshrl.u32 %v1442, 7
        %v1444 = vsub.s32 %v1431, %v1443
        %v1445 = vrot.slane %v1404, %v1444
        %v1446 = vsel %vm1436, %v1445, %v1441
        %v1447 = vlaneseq
        %v1448 = vshrl.u32 %v1447, 7
        %v1449 = vsub.s32 %v1426, %v1448
        %v1450 = vrot.slane %v1407, %v1449
        %v1451 = vlaneseq
        %v1452 = vshrl.u32 %v1451, 7
        %v1453 = vsub.s32 %v1431, %v1452
        %v1454 = vrot.slane %v1410, %v1453
        %v1455 = vsel %vm1436, %v1454, %v1450
        %v1456 = vlaneseq
        %v1457 = vshrl.u32 %v1456, 7
        %v1458 = vsub.s32 %v1426, %v1457
        %v1459 = vrot.slane %v1413, %v1458
        %v1460 = vlaneseq
        %v1461 = vshrl.u32 %v1460, 7
        %v1462 = vsub.s32 %v1431, %v1461
        %v1463 = vrot.slane %v1416, %v1462
        %v1464 = vsel %vm1436, %v1463, %v1459
        %vm1465 = vcmask 1041409
        %v1466 = vsel %vm1465, %v1446, %v1437
        %vm1467 = vcmask 1042434
        %v1468 = vsel %vm1467, %v1455, %v1466
        %vm1469 = vcmask 1043459
        %v1470 = vsel %vm1469, %v1464, %v1468
        %vm1472 = vcmask 125952
        %v1473 = vsel %vm1472, %v1470, 0.0
        %1474 = vadd.xlane.f32.xlu0 %v1473
        %v1475 = vpop.xlane.xlu0 %1474
        %v1476 = vsel %vm1392, %v696, 0.0
        %1477 = vadd.xlane.f32.xlu0 %v1476
        %v1478 = vpop.xlane.xlu0 %1477
        %v1479 = vsel %vm1392, %v697, 0.0
        %1480 = vadd.xlane.f32.xlu0 %v1479
        %v1481 = vpop.xlane.xlu0 %1480
        %v1482 = vsel %vm1392, %v698, 0.0
        %1483 = vadd.xlane.f32.xlu0 %v1482
        %v1484 = vpop.xlane.xlu0 %1483
        %v1485 = vsel %vm1392, %v699, 0.0
        %1486 = vadd.xlane.f32.xlu0 %v1485
        %v1487 = vpop.xlane.xlu0 %1486
        %v1488 = vsel %vm1392, %v700, 0.0
        %1489 = vadd.xlane.f32.xlu0 %v1488
        %v1490 = vpop.xlane.xlu0 %1489
        %v1491 = vsel %vm1392, %v701, 0.0
        %1492 = vadd.xlane.f32.xlu0 %v1491
        %v1493 = vpop.xlane.xlu0 %1492
        %v1494 = vsel %vm1392, %v702, 0.0
        %1495 = vadd.xlane.f32.xlu0 %v1494
        %v1496 = vpop.xlane.xlu0 %1495
        %v1497 = vsel %vm1392, %v703, 0.0
        %1498 = vadd.xlane.f32.xlu0 %v1497
        %v1499 = vpop.xlane.xlu0 %1498
        %v1508 = vlaneseq
        %v1509 = vshrl.u32 %v1508, 7
        %v1510 = vsub.s32 %v1426, %v1509
        %v1511 = vrot.slane %v1478, %v1510
        %v1512 = vlaneseq
        %v1513 = vshrl.u32 %v1512, 7
        %v1514 = vsub.s32 %v1431, %v1513
        %v1515 = vrot.slane %v1481, %v1514
        %v1516 = vsel %vm1436, %v1515, %v1511
        %v1517 = vlaneseq
        %v1518 = vshrl.u32 %v1517, 7
        %v1519 = vsub.s32 %v1426, %v1518
        %v1520 = vrot.slane %v1484, %v1519
        %v1521 = vlaneseq
        %v1522 = vshrl.u32 %v1521, 7
        %v1523 = vsub.s32 %v1431, %v1522
        %v1524 = vrot.slane %v1487, %v1523
        %v1525 = vsel %vm1436, %v1524, %v1520
        %v1526 = vlaneseq
        %v1527 = vshrl.u32 %v1526, 7
        %v1528 = vsub.s32 %v1426, %v1527
        %v1529 = vrot.slane %v1490, %v1528
        %v1530 = vlaneseq
        %v1531 = vshrl.u32 %v1530, 7
        %v1532 = vsub.s32 %v1431, %v1531
        %v1533 = vrot.slane %v1493, %v1532
        %v1534 = vsel %vm1436, %v1533, %v1529
        %v1535 = vlaneseq
        %v1536 = vshrl.u32 %v1535, 7
        %v1537 = vsub.s32 %v1426, %v1536
        %v1538 = vrot.slane %v1496, %v1537
        %v1539 = vlaneseq
        %v1540 = vshrl.u32 %v1539, 7
        %v1541 = vsub.s32 %v1431, %v1540
        %v1542 = vrot.slane %v1499, %v1541
        %v1543 = vsel %vm1436, %v1542, %v1538
        %v1544 = vsel %vm1465, %v1525, %v1516
        %v1545 = vsel %vm1467, %v1534, %v1544
        %v1546 = vsel %vm1469, %v1543, %v1545
        %v1548 = vsel %vm1472, %v1546, 0.0
        %1549 = vadd.xlane.f32.xlu0 %v1548
        %v1550 = vpop.xlane.xlu0 %1549
        %v1551 = vmul.f32 %v1376, %v512
        %v1552 = vmul.f32 %v1377, %v513
        %v1553 = vmul.f32 %v1378, %v514
        %v1554 = vmul.f32 %v1379, %v515
        %v1555 = vmul.f32 %v1380, %v516
        %v1556 = vmul.f32 %v1381, %v517
        %v1557 = vmul.f32 %v1382, %v518
        %v1558 = vmul.f32 %v1383, %v519
        %v1559 = vsel %vm1392, %v1551, 0.0
        %1560 = vadd.xlane.f32.xlu0 %v1559
        %v1561 = vpop.xlane.xlu0 %1560
        %v1562 = vsel %vm1392, %v1552, 0.0
        %1563 = vadd.xlane.f32.xlu0 %v1562
        %v1564 = vpop.xlane.xlu0 %1563
        %v1565 = vsel %vm1392, %v1553, 0.0
        %1566 = vadd.xlane.f32.xlu0 %v1565
        %v1567 = vpop.xlane.xlu0 %1566
        %v1568 = vsel %vm1392, %v1554, 0.0
        %1569 = vadd.xlane.f32.xlu0 %v1568
        %v1570 = vpop.xlane.xlu0 %1569
        %v1571 = vsel %vm1392, %v1555, 0.0
        %1572 = vadd.xlane.f32.xlu0 %v1571
        %v1573 = vpop.xlane.xlu0 %1572
        %v1574 = vsel %vm1392, %v1556, 0.0
        %1575 = vadd.xlane.f32.xlu0 %v1574
        %v1576 = vpop.xlane.xlu0 %1575
        %v1577 = vsel %vm1392, %v1557, 0.0
        %1578 = vadd.xlane.f32.xlu0 %v1577
        %v1579 = vpop.xlane.xlu0 %1578
        %v1580 = vsel %vm1392, %v1558, 0.0
        %1581 = vadd.xlane.f32.xlu0 %v1580
        %v1582 = vpop.xlane.xlu0 %1581
        %v1591 = vlaneseq
        %v1592 = vshrl.u32 %v1591, 7
        %v1593 = vsub.s32 %v1426, %v1592
        %v1594 = vrot.slane %v1561, %v1593
        %v1595 = vlaneseq
        %v1596 = vshrl.u32 %v1595, 7
        %v1597 = vsub.s32 %v1431, %v1596
        %v1598 = vrot.slane %v1564, %v1597
        %v1599 = vsel %vm1436, %v1598, %v1594
        %v1600 = vlaneseq
        %v1601 = vshrl.u32 %v1600, 7
        %v1602 = vsub.s32 %v1426, %v1601
        %v1603 = vrot.slane %v1567, %v1602
        %v1604 = vlaneseq
        %v1605 = vshrl.u32 %v1604, 7
        %v1606 = vsub.s32 %v1431, %v1605
        %v1607 = vrot.slane %v1570, %v1606
        %v1608 = vsel %vm1436, %v1607, %v1603
        %v1609 = vlaneseq
        %v1610 = vshrl.u32 %v1609, 7
        %v1611 = vsub.s32 %v1426, %v1610
        %v1612 = vrot.slane %v1573, %v1611
        %v1613 = vlaneseq
        %v1614 = vshrl.u32 %v1613, 7
        %v1615 = vsub.s32 %v1431, %v1614
        %v1616 = vrot.slane %v1576, %v1615
        %v1617 = vsel %vm1436, %v1616, %v1612
        %v1618 = vlaneseq
        %v1619 = vshrl.u32 %v1618, 7
        %v1620 = vsub.s32 %v1426, %v1619
        %v1621 = vrot.slane %v1579, %v1620
        %v1622 = vlaneseq
        %v1623 = vshrl.u32 %v1622, 7
        %v1624 = vsub.s32 %v1431, %v1623
        %v1625 = vrot.slane %v1582, %v1624
        %v1626 = vsel %vm1436, %v1625, %v1621
        %v1627 = vsel %vm1465, %v1608, %v1599
        %v1628 = vsel %vm1467, %v1617, %v1627
        %v1629 = vsel %vm1469, %v1626, %v1628
        %v1631 = vsel %vm1472, %v1629, 0.0
        %1632 = vadd.xlane.f32.xlu0 %v1631
        %v1633 = vpop.xlane.xlu0 %1632
        %v1634 = vsel %vm1392, %v512, 0.0
        %1635 = vadd.xlane.f32.xlu0 %v1634
        %v1636 = vpop.xlane.xlu0 %1635
        %v1637 = vsel %vm1392, %v513, 0.0
        %1638 = vadd.xlane.f32.xlu0 %v1637
        %v1639 = vpop.xlane.xlu0 %1638
        %v1640 = vsel %vm1392, %v514, 0.0
        %1641 = vadd.xlane.f32.xlu0 %v1640
        %v1642 = vpop.xlane.xlu0 %1641
        %v1643 = vsel %vm1392, %v515, 0.0
        %1644 = vadd.xlane.f32.xlu0 %v1643
        %v1645 = vpop.xlane.xlu0 %1644
        %v1646 = vsel %vm1392, %v516, 0.0
        %1647 = vadd.xlane.f32.xlu0 %v1646
        %v1648 = vpop.xlane.xlu0 %1647
        %v1649 = vsel %vm1392, %v517, 0.0
        %1650 = vadd.xlane.f32.xlu0 %v1649
        %v1651 = vpop.xlane.xlu0 %1650
        %v1652 = vsel %vm1392, %v518, 0.0
        %1653 = vadd.xlane.f32.xlu0 %v1652
        %v1654 = vpop.xlane.xlu0 %1653
        %v1655 = vsel %vm1392, %v519, 0.0
        %1656 = vadd.xlane.f32.xlu0 %v1655
        %v1657 = vpop.xlane.xlu0 %1656
        %v1666 = vlaneseq
        %v1667 = vshrl.u32 %v1666, 7
        %v1668 = vsub.s32 %v1426, %v1667
        %v1669 = vrot.slane %v1636, %v1668
        %v1670 = vlaneseq
        %v1671 = vshrl.u32 %v1670, 7
        %v1672 = vsub.s32 %v1431, %v1671
        %v1673 = vrot.slane %v1639, %v1672
        %v1674 = vsel %vm1436, %v1673, %v1669
        %v1675 = vlaneseq
        %v1676 = vshrl.u32 %v1675, 7
        %v1677 = vsub.s32 %v1426, %v1676
        %v1678 = vrot.slane %v1642, %v1677
        %v1679 = vlaneseq
        %v1680 = vshrl.u32 %v1679, 7
        %v1681 = vsub.s32 %v1431, %v1680
        %v1682 = vrot.slane %v1645, %v1681
        %v1683 = vsel %vm1436, %v1682, %v1678
        %v1684 = vlaneseq
        %v1685 = vshrl.u32 %v1684, 7
        %v1686 = vsub.s32 %v1426, %v1685
        %v1687 = vrot.slane %v1648, %v1686
        %v1688 = vlaneseq
        %v1689 = vshrl.u32 %v1688, 7
        %v1690 = vsub.s32 %v1431, %v1689
        %v1691 = vrot.slane %v1651, %v1690
        %v1692 = vsel %vm1436, %v1691, %v1687
        %v1693 = vlaneseq
        %v1694 = vshrl.u32 %v1693, 7
        %v1695 = vsub.s32 %v1426, %v1694
        %v1696 = vrot.slane %v1654, %v1695
        %v1697 = vlaneseq
        %v1698 = vshrl.u32 %v1697, 7
        %v1699 = vsub.s32 %v1431, %v1698
        %v1700 = vrot.slane %v1657, %v1699
        %v1701 = vsel %vm1436, %v1700, %v1696
        %v1702 = vsel %vm1465, %v1683, %v1674
        %v1703 = vsel %vm1467, %v1692, %v1702
        %v1704 = vsel %vm1469, %v1701, %v1703
        %v1706 = vsel %vm1472, %v1704, 0.0
        %1707 = vadd.xlane.f32.xlu0 %v1706
        %v1708 = vpop.xlane.xlu0 %1707
        %v1709 = vsel %vm487, %v1475, %v1550
        %v1710 = vsel %vm1023, %v1709, %v1633
        %vm1711 = vcmask 23552
        %v1712 = vsel %vm1711, %v1710, %v1708
        %vm1713 = vcmask 27648
        %1714 = vst.msk [vmem:[%s220] sm:$0xf] %vm1713, %v1712
        %s1715 = sand.u32 %s98, 1
        %s1716 = scalar_lea.sflag [#allocation4], %s1715
        %s1717 = sand.u32 %s98, 1
        %s1718 = smul.addr %s1717, 4
        %s1719 = scalar_lea.vmem [#allocation7], %s1718
        // Predicated region
        $region37: #{tpu_custom_call.1} parent=27 // pred_check
          %p1720 = pneg %p108
        $region38: #{tpu_custom_call.1} parent=27 // pred_check_branch
          %1722 = sbr.rel (%p1720) target = $region40
        $region39: #{tpu_custom_call.1} parent=27 // pred_region
          %s1724 = ssub.s32 64, 64
          %1725 = vsyncadd %s1716, %s1724
          %s1726 = sadd.s32 %s27, %s26
          %s1727 = smul.addr %s1726, 64
          %s1728 = scalar_lea.hbm %s2, %s1727
          %s1730 = sshll.u32 %s1719, 4
          %s1731 = int_to_ptr.vmem [resolvable:$true] %s1730
          %1733 = dma.vmem_to_hbm [thread:$0]  %s1731, 64, %s1728, %s1716
        $region40: #{tpu_custom_call.1} parent=27 // pred_fallthru
          _
      $region28: #{tpu_custom_call.1} parent=5 // pred_fallthru
        _
      %p1734 = scmp.le.s32.totalorder 2, %s17
      // Predicated region
      $region41: #{tpu_custom_call.1} parent=5 // pred_check
        %p1735 = pneg %p1734
      $region42: #{tpu_custom_call.1} parent=5 // pred_check_branch
        %1737 = sbr.rel (%p1735) target = $region44
      $region43: #{tpu_custom_call.1} parent=5 // pred_region
        %s1738 = ssub.s32 %s17, 2
        // Predicated region
        $region45: #{tpu_custom_call.1} parent=43 // pred_check
          %p1739 = pneg %p114
        $region46: #{tpu_custom_call.1} parent=43 // pred_check_branch
          %1741 = sbr.rel (%p1739) target = $region48
        $region47: #{tpu_custom_call.1} parent=43 // pred_region
          %s1742 = sand.u32 %s99, 1
          %s1743 = scalar_lea.sflag [#allocation4], %s1742
          %s1744 = sand.u32 %s99, 1
          %s1745 = smul.addr %s1744, 4
          %s1746 = scalar_lea.vmem [#allocation7], %s1745
          %1747 = dma.done %s1743, 64
        $region48: #{tpu_custom_call.1} parent=43 // pred_fallthru
          _
      $region44: #{tpu_custom_call.1} parent=5 // pred_fallthru
        _
    $region6: #{tpu_custom_call.1} parent=1 // loop_footer
      %s21 = sadd.s32 1, %s17
    $region7: #{tpu_custom_call.1} parent=1 // loop_footer_branch
      %16 = sbr.rel target = $region3
    $region8: #{tpu_custom_call.1} parent=1 // loop_exit
      _
    %1748 = vsyncpa [#allocation3], 1
    %s1749 = scalar_lea.sflag [#allocation3], 1
    %1750 = vsyncpa %s1749, 1
    %1751 = vsyncpa [#allocation6], 1
    %s1752 = scalar_lea.sflag [#allocation6], 1
    %1753 = vsyncpa %s1752, 1
    %1754 = vsyncpa [#allocation4], 1
    %s1755 = scalar_lea.sflag [#allocation4], 1
    %1756 = vsyncpa %s1755, 1

</llo_original>
